<compile_context>
chip_gen: v5e
topology: v5e:2x2
jax: 0.10.0
libtpu: 0.0.40
codegen_flags: <defaults>
</compile_context>

<pallas_src>
import numpy as np
import jax
import jax.numpy as jnp
from jax import lax
from jax.experimental import pallas as pl
from jax.experimental.pallas import tpu as pltpu


def _round_up(x, m):
    return ((x + m - 1) // m) * m


# Abramowitz & Stegun 4.4.46 minimax polynomial:
#   acos(x) ~= sqrt(1-x) * P(x) for 0 <= x <= 1, |error| <= 2e-8 rad.
_ACOS_COEFFS = (
    -0.0012624911, 0.0066700901, -0.0170881256, 0.0308918810,
    -0.0501743046, 0.0889789874, -0.2145988016, 1.5707963050,
)


def _acos(x):
    ax = jnp.abs(x)
    p = jnp.float32(_ACOS_COEFFS[0])
    for c in _ACOS_COEFFS[1:]:
        p = p * ax + jnp.float32(c)
    r = jnp.sqrt(jnp.maximum(1.0 - ax, 0.0)) * p
    return jnp.where(x < 0.0, jnp.float32(np.pi) - r, r)


def _cos_tile(d1_ref, d2_ref, geoms_ref, tb):
    # d1/d2: (3*tb, K_pad) one-hot difference matrices (coordinate-major rows).
    # geoms: (K_pad, tc) lane-dense slab, row 3*atom + coord.
    g = geoms_ref[...]
    v1 = jnp.dot(d1_ref[...], g, preferred_element_type=jnp.float32,
                 precision=jax.lax.Precision.HIGHEST)
    v2 = jnp.dot(d2_ref[...], g, preferred_element_type=jnp.float32,
                 precision=jax.lax.Precision.HIGHEST)
    # tb is a multiple of 8, so these static slices land on sublane boundaries.
    x1, y1, z1 = v1[:tb], v1[tb:2 * tb], v1[2 * tb:]
    x2, y2, z2 = v2[:tb], v2[tb:2 * tb], v2[2 * tb:]
    dots = x1 * x2 + y1 * y2 + z1 * z2
    n1sq = x1 * x1 + y1 * y1 + z1 * z1
    n2sq = x2 * x2 + y2 * y2 + z2 * z2
    return dots * lax.rsqrt(n1sq * n2sq)


def _angles_cos_kernel(d1_ref, d2_ref, geoms_ref, out_ref):
    tb = out_ref.shape[0]
    out_ref[...] = _cos_tile(d1_ref, d2_ref, geoms_ref, tb)


def _angles_dev_kernel(d1_ref, d2_ref, geoms_ref, off_ref, scale_ref, out_ref):
    tb = out_ref.shape[0]
    cos = _cos_tile(d1_ref, d2_ref, geoms_ref, tb)
    aa = _acos(cos * jnp.float32(0.999999))
    out_ref[...] = (aa - off_ref[...]) * scale_ref[...]   # (tb,1) broadcast over lanes


def angles_model_forward(geoms, angles, angles_th0=None, *, max_tb=256, max_tc=512):
    """AnglesModel.forward.

    geoms:      [n_atoms, 3, n_conf] float32 coordinates.
    angles:     [n_angles, 3] int triplets (i, j, k), angle centered at j.
    angles_th0: optional [n_angles] reference angles (radians).
    Returns [n_angles, n_conf]: cos(angle), or the normalized deviation
    (arccos(cos*0.999999) - 0.75*th0) * (2/th0) if angles_th0 is given.
    """
    geoms = jnp.asarray(geoms, jnp.float32)
    n_atoms, three, n_conf = geoms.shape
    assert three == 3 and n_conf >= 1
    angles_np = np.asarray(angles, dtype=np.int64).reshape(-1, 3)
    n_ang = angles_np.shape[0]
    if n_ang == 0:
        return jnp.zeros((0, n_conf), jnp.float32)

    K = n_atoms * 3
    K_pad = _round_up(K, 128)          # contraction dim of the one-hot gather matmul

    # ---- tile sizes (tb angles x tc conformations per grid step) --------------
    tc = min(max_tc, _round_up(n_conf, 128))
    tb = min(max_tb, _round_up(n_ang, 8))

    def vmem_need(tb_, tc_):
        geoms_b = 2 * K_pad * tc_ * 4            # geoms slab, double-buffered
        d_b = 2 * 2 * (3 * tb_) * K_pad * 4      # D1 + D2 blocks, double-buffered
        out_b = 2 * tb_ * tc_ * 4                # output block, double-buffered
        th0_b = 2 * 2 * tb_ * 4                  # per-angle scalars (th0 branch)
        return geoms_b + d_b + out_b + th0_b

    budget = 36 * 1024 * 1024                    # fits v7x's 64 MiB/TC with headroom
    while vmem_need(tb, tc) > budget and tc > 128:
        tc = max(128, _round_up(tc // 2, 128))
    while vmem_need(tb, tc) > budget and tb > 8:
        tb = max(8, _round_up(tb // 2, 8))

    # Megacore (v7x has 2 TCs sharded over "parallel" axes): ensure >= 2 grid steps.
    def n_steps(tb_, tc_):
        return (_round_up(n_conf, tc_) // tc_) * (_round_up(n_ang, tb_) // tb_)

    while n_steps(tb, tc) < 2 and tb > 8:
        tb = max(8, _round_up(tb // 2, 8))

    c_pad = _round_up(n_conf, tc)
    n_pad = _round_up(n_ang, tb)
    n_cchunks = c_pad // tc
    n_bchunks = n_pad // tb

    # ---- lane-dense geometry slab: row 3*atom + coord.  Padded conformation
    # columns copy the last valid column so padded lanes stay finite. -----------
    geoms2d = geoms.reshape(K, n_conf)
    if c_pad != n_conf:
        geoms2d = jnp.pad(geoms2d, ((0, 0), (0, c_pad - n_conf)), mode="edge")
    if K_pad != K:
        geoms2d = jnp.pad(geoms2d, ((0, K_pad - K), (0, 0)))

    # ---- pad the angle list by repeating the last valid triplet ---------------
    if n_pad != n_ang:
        pad_rows = np.repeat(angles_np[-1:], n_pad - n_ang, axis=0)
        angles_pad = np.concatenate([angles_np, pad_rows], axis=0)
    else:
        angles_pad = angles_np

    # ---- one-hot difference matrices for the MXU gather (coordinate-major) ----
    d1 = np.zeros((3 * n_pad, K_pad), np.float32)
    d2 = np.zeros((3 * n_pad, K_pad), np.float32)
    i_idx, j_idx, k_idx = angles_pad[:, 0], angles_pad[:, 1], angles_pad[:, 2]
    for b in range(n_bchunks):
        sel = slice(b * tb, (b + 1) * tb)
        ii, jj, kk = i_idx[sel], j_idx[sel], k_idx[sel]
        for c in range(3):
            rows = b * 3 * tb + c * tb + np.arange(tb)
            np.add.at(d1, (rows, 3 * ii + c), 1.0)
            np.add.at(d1, (rows, 3 * jj + c), -1.0)
            np.add.at(d2, (rows, 3 * kk + c), 1.0)
            np.add.at(d2, (rows, 3 * jj + c), -1.0)
    d1 = jnp.asarray(d1)
    d2 = jnp.asarray(d2)

    d_spec = pl.BlockSpec((3 * tb, K_pad), lambda c, b: (b, 0))
    geoms_spec = pl.BlockSpec((K_pad, tc), lambda c, b: (0, c))   # reused across b
    out_spec = pl.BlockSpec((tb, tc), lambda c, b: (b, c))

    vmem_limit = int(min(max(vmem_need(tb, tc) + (16 << 20), 32 << 20), 56 << 20))
    cparams = pltpu.CompilerParams(
        dimension_semantics=("parallel", "parallel"),
        vmem_limit_bytes=vmem_limit,
    )

    if angles_th0 is None:
        out_full = pl.pallas_call(
            _angles_cos_kernel,
            out_shape=jax.ShapeDtypeStruct((n_pad, c_pad), jnp.float32),
            grid_spec=pltpu.PrefetchScalarGridSpec(
                num_scalar_prefetch=0,
                grid=(n_cchunks, n_bchunks),   # angle chunks innermost -> geoms slab reused
                in_specs=[d_spec, d_spec, geoms_spec],
                out_specs=out_spec,
            ),
            compiler_params=cparams,
        )(d1, d2, geoms2d)
        return out_full[:n_ang, :n_conf]

    th0_np = np.asarray(angles_th0, np.float32).reshape(-1)
    assert th0_np.shape[0] == n_ang
    th0_pad = np.concatenate(
        [th0_np, np.full(n_pad - n_ang, 1.0, np.float32)]) if n_pad != n_ang else th0_np
    off = jnp.asarray(0.75 * th0_pad).reshape(n_pad, 1)
    scale = jnp.asarray(2.0 / th0_pad).reshape(n_pad, 1)
    th0_spec = pl.BlockSpec((tb, 1), lambda c, b: (b, 0))

    out_full = pl.pallas_call(
        _angles_dev_kernel,
        out_shape=jax.ShapeDtypeStruct((n_pad, c_pad), jnp.float32),
        grid_spec=pltpu.PrefetchScalarGridSpec(
            num_scalar_prefetch=0,
            grid=(n_cchunks, n_bchunks),
            in_specs=[d_spec, d_spec, geoms_spec, th0_spec, th0_spec],
            out_specs=out_spec,
        ),
        compiler_params=cparams,
    )(d1, d2, geoms2d, off, scale)
    return out_full[:n_ang, :n_conf]


if __name__ == "__main__":
    # Small, deterministic example consistent with the module's forward.
    n_atoms = 16
    n_conf = 200  # deliberately not a multiple of 128 to exercise lane padding

    key = jax.random.PRNGKey(0)
    geoms = jax.random.normal(key, (n_atoms, 3, n_conf), dtype=jnp.float32)

    # Deterministic chain of angle triplets (i, i+1, i+2), centered at i+1.
    angles_np = np.stack(
        [np.arange(0, n_atoms - 2),
         np.arange(1, n_atoms - 1),
         np.arange(2, n_atoms)], axis=1).astype(np.int32)  # (14, 3)

    # Pure-JAX reference of the PyTorch forward.
    gi = geoms[angles_np[:, 0]]
    gj = geoms[angles_np[:, 1]]
    gk = geoms[angles_np[:, 2]]
    v1 = gi - gj
    v2 = gk - gj
    n1 = jnp.sqrt(jnp.sum(v1 * v1, axis=1))
    n2 = jnp.sqrt(jnp.sum(v2 * v2, axis=1))
    ref_cos = jnp.sum(v1 * v2, axis=1) / (n1 * n2)

    # --- mode 1: angles_th0 is None -> plain cos(angle) ---
    cos_out = jax.block_until_ready(angles_model_forward(geoms, angles_np, None))
    assert cos_out.shape == (angles_np.shape[0], n_conf)
    assert bool(jnp.all(jnp.isfinite(cos_out)))
    assert jnp.allclose(cos_out, ref_cos, atol=2e-4, rtol=2e-4)

    # --- mode 2: with reference angles th0 -> normalized deviations (fused acos) ---
    th0_np = np.linspace(1.6, 2.1, angles_np.shape[0]).astype(np.float32)
    dev_out = jax.block_until_ready(angles_model_forward(geoms, angles_np, th0_np))

    th0 = jnp.asarray(th0_np)
    ref_aa = jnp.arccos(ref_cos * 0.999999)
    ref_dev = (ref_aa - 0.75 * th0[:, None]) * (2.0 / th0)[:, None]
    assert dev_out.shape == (angles_np.shape[0], n_conf)
    assert bool(jnp.all(jnp.isfinite(dev_out)))
    assert jnp.allclose(dev_out, ref_dev, atol=2e-3, rtol=1e-3)

    print("KERNEL_OK")
</pallas_src>

<mosaic_0001>
module attributes {stable_mosaic.version = 11 : i64} {
  func.func @_angles_cos_kernel(%arg0: i32, %arg1: i32, %arg2: memref<24x128xf32, #tpu.memory_space<vmem>>, %arg3: memref<24x128xf32, #tpu.memory_space<vmem>>, %arg4: memref<128x256xf32, #tpu.memory_space<vmem>>, %arg5: memref<8x256xf32, #tpu.memory_space<vmem>>) attributes {dimension_semantics = [#tpu.dimension_semantics<parallel>, #tpu.dimension_semantics<parallel>], iteration_bounds = array<i64: 1, 2>, scalar_prefetch = 0 : i64, scratch_operands = 0 : i64, tpu.core_type = #tpu.core_type<tc>, window_params = [{transform_indices = @transform_0, window_bounds = array<i64: 24, 128>}, {transform_indices = @transform_1, window_bounds = array<i64: 24, 128>}, {transform_indices = @transform_2, window_bounds = array<i64: 128, 256>}, {transform_indices = @transform_3, window_bounds = array<i64: 8, 256>}]} {
    %c0 = arith.constant 0 : index
    %c0_0 = arith.constant 0 : index
    %0 = vector.load %arg4[%c0, %c0_0] : memref<128x256xf32, #tpu.memory_space<vmem>>, vector<128x256xf32>
    %c0_1 = arith.constant 0 : index
    %c0_2 = arith.constant 0 : index
    %1 = vector.load %arg2[%c0_1, %c0_2] : memref<24x128xf32, #tpu.memory_space<vmem>>, vector<24x128xf32>
    %cst = arith.constant dense<0.000000e+00> : vector<24x256xf32>
    %2 = tpu.matmul %1, %0, %cst {dimension_numbers = #tpu.dot_dimension_numbers<[1], [0], [0], [1], [0, 0, 1, 1], [], []>, precision = #tpu.contract_precision<fp32>} : vector<24x128xf32>, vector<128x256xf32>, vector<24x256xf32> -> vector<24x256xf32>
    %c0_3 = arith.constant 0 : index
    %c0_4 = arith.constant 0 : index
    %3 = vector.load %arg3[%c0_3, %c0_4] : memref<24x128xf32, #tpu.memory_space<vmem>>, vector<24x128xf32>
    %cst_5 = arith.constant dense<0.000000e+00> : vector<24x256xf32>
    %4 = tpu.matmul %3, %0, %cst_5 {dimension_numbers = #tpu.dot_dimension_numbers<[1], [0], [0], [1], [0, 0, 1, 1], [], []>, precision = #tpu.contract_precision<fp32>} : vector<24x128xf32>, vector<128x256xf32>, vector<24x256xf32> -> vector<24x256xf32>
    %5 = vector.extract_strided_slice %2 {offsets = [0, 0], sizes = [8, 256], strides = [1, 1]} : vector<24x256xf32> to vector<8x256xf32>
    %6 = vector.extract_strided_slice %2 {offsets = [8, 0], sizes = [8, 256], strides = [1, 1]} : vector<24x256xf32> to vector<8x256xf32>
    %7 = vector.extract_strided_slice %2 {offsets = [16, 0], sizes = [8, 256], strides = [1, 1]} : vector<24x256xf32> to vector<8x256xf32>
    %8 = vector.extract_strided_slice %4 {offsets = [0, 0], sizes = [8, 256], strides = [1, 1]} : vector<24x256xf32> to vector<8x256xf32>
    %9 = vector.extract_strided_slice %4 {offsets = [8, 0], sizes = [8, 256], strides = [1, 1]} : vector<24x256xf32> to vector<8x256xf32>
    %10 = vector.extract_strided_slice %4 {offsets = [16, 0], sizes = [8, 256], strides = [1, 1]} : vector<24x256xf32> to vector<8x256xf32>
    %11 = arith.mulf %5, %8 : vector<8x256xf32>
    %12 = arith.mulf %6, %9 : vector<8x256xf32>
    %13 = arith.addf %11, %12 : vector<8x256xf32>
    %14 = arith.mulf %7, %10 : vector<8x256xf32>
    %15 = arith.addf %13, %14 : vector<8x256xf32>
    %16 = arith.mulf %5, %5 : vector<8x256xf32>
    %17 = arith.mulf %6, %6 : vector<8x256xf32>
    %18 = arith.addf %16, %17 : vector<8x256xf32>
    %19 = arith.mulf %7, %7 : vector<8x256xf32>
    %20 = arith.addf %18, %19 : vector<8x256xf32>
    %21 = arith.mulf %8, %8 : vector<8x256xf32>
    %22 = arith.mulf %9, %9 : vector<8x256xf32>
    %23 = arith.addf %21, %22 : vector<8x256xf32>
    %24 = arith.mulf %10, %10 : vector<8x256xf32>
    %25 = arith.addf %23, %24 : vector<8x256xf32>
    %26 = arith.mulf %20, %25 : vector<8x256xf32>
    %27 = math.rsqrt %26 : vector<8x256xf32>
    %28 = arith.mulf %15, %27 : vector<8x256xf32>
    %c0_6 = arith.constant 0 : index
    %c0_7 = arith.constant 0 : index
    %29 = vector.load %arg5[%c0_6, %c0_7] : memref<8x256xf32, #tpu.memory_space<vmem>>, vector<8x256xf32>
    tpu.vector_store %arg5[%c0_6, %c0_7], %28 {strides = array<i32>} : memref<8x256xf32, #tpu.memory_space<vmem>>, vector<8x256xf32>,
    return
  }
  func.func @transform_0(%arg0: i32, %arg1: i32) -> (i32, i32) {
    %c0_i32 = arith.constant 0 : i32
    %c0_i32_0 = arith.constant 0 : i32
    return %arg1, %c0_i32 : i32, i32
  }
  func.func @transform_1(%arg0: i32, %arg1: i32) -> (i32, i32) {
    %c0_i32 = arith.constant 0 : i32
    %c0_i32_0 = arith.constant 0 : i32
    return %arg1, %c0_i32 : i32, i32
  }
  func.func @transform_2(%arg0: i32, %arg1: i32) -> (i32, i32) {
    %c0_i32 = arith.constant 0 : i32
    %c0_i32_0 = arith.constant 0 : i32
    return %c0_i32, %arg0 : i32, i32
  }
  func.func @transform_3(%arg0: i32, %arg1: i32) -> (i32, i32) {
    %c0_i32 = arith.constant 0 : i32
    return %arg1, %arg0 : i32, i32
  }
}

</mosaic_0001>

<llo_original>
// kernel: tpu_custom_call.1
$region0: #{tpu_custom_call.1}
  #allocation0 [shape = 'u32[]', space=smem, size = 0x4, offset = 0x4, fixed_abs, tag = 'smem constant byte address 0x4 - core index']
  #allocation1 [shape = 'u32[72,128]{1,0:T(1,128)}', space=vmem, size = 0x9000, scoped, tag = 'internal scratch']
  %s0 = inlined_call_operand.hbm [shape: f32[48,128], index: 0, kind: input, shape index: {}]
  %s1 = inlined_call_operand.hbm [shape: f32[48,128], index: 1, kind: input, shape index: {}]
  %s2 = inlined_call_operand.hbm [shape: f32[128,256], index: 2, kind: input, shape index: {}]
  %s3 = inlined_call_operand.hbm [shape: f32[16,256], index: 3, kind: output, shape index: {}]
  %s4 = sld [smem:[#allocation0]]
  $region57: #{tpu_custom_call.1} parent=0
    _
  %s6 = ssub.s32 1, %s4
  %s7 = scalar_select 0, %s6, %s4
  $region1: #{tpu_custom_call.1} parent=0
    #allocation2 [shape = 'u8[24576]{0}', space=vmem, size = 0x6000, scoped, tag = 'input window, operand 0']
    #allocation3 [shape = 's32[2]{0}', space=sflag, size = 0x8, scoped, tag = 'scoped memory for tpu_custom_call.1']
    #allocation4 [shape = 's32[2]{0}', space=sflag, size = 0x8, scoped, tag = 'scoped memory for tpu_custom_call.1']
    #allocation5 [shape = 'u8[24576]{0}', space=vmem, size = 0x6000, scoped, tag = 'input window, operand 1']
    #allocation6 [shape = 's32[2]{0}', space=sflag, size = 0x8, scoped, tag = 'scoped memory for tpu_custom_call.1']
    #allocation7 [shape = 'u8[131072]{0}', space=vmem, size = 0x20000, scoped, tag = 'input window, operand 2, single buffered']
    #allocation8 [shape = 'u8[16384]{0}', space=vmem, size = 0x4000, scoped, tag = 'output window, operand 0']
    %8 = vsyncpa [#allocation3], 0
    %s9 = scalar_lea.sflag [#allocation3], 1
    %10 = vsyncpa %s9, 0
    %11 = vsyncpa [#allocation6], 0
    %s12 = scalar_lea.sflag [#allocation6], 1
    %13 = vsyncpa %s12, 0
    %14 = vsyncpa [#allocation4], 0
    %s15 = scalar_lea.sflag [#allocation4], 1
    %16 = vsyncpa %s15, 0
    loop: start=0, step=1, limit=4
    $region2: #{tpu_custom_call.1} parent=1 // loop_pre_header
      _
    $region3: #{tpu_custom_call.1} parent=1 // loop_header
      %s18 = sphi 0, %s22
      %p19 = scmp.ge.s32.totalorder %s18, 4
      %s25 = sphi 0, %s37
      %s26 = sphi 0, %s33
      %s27 = sphi 0, %s25
      %s28 = sphi 0, %s26
      %s29 = sphi 0, %s27
      %s30 = sphi 0, %s28
      %s40 = sphi 0, %s42
      %s43 = sphi 0, %s40
      %s44 = sphi 0, %s43
      %s60 = sphi 0, %s44
      %s66 = sphi 0, %s68
      %s69 = sphi 0, %s66
      %s70 = sphi 0, %s69
      %s86 = sphi 0, %s70
      %s92 = sphi 0, %s94
      %s95 = sphi 0, %s92
      %s96 = sphi 0, %s95
      %s112 = sphi 0, %s96
      %s120 = sphi 0, %s122
      %s123 = sphi 0, %s120
      %s124 = sphi 0, %s123
      %s140 = sphi 0, %s124
    $region4: #{tpu_custom_call.1} parent=1 // loop_header_branch
      %21 = sbr.rel (%p19) target = $region8
    $region5: #{tpu_custom_call.1} parent=1 // loop_body
      %s23 = ssub.s32 %s18, 1
      %s24 = ssub.s32 %s18, 2
      %s31 = sadd.s32 1, %s26
      %p32 = scmp.ge.s32.totalorder %s31, 2
      %s33 = scalar_select %p32, 0, %s31
      %s34 = sadd.s32 1, %s25
      %s35 = scalar_select %p32, %s34, %s25
      %p36 = scmp.ge.s32.totalorder %s35, 1
      %s37 = scalar_select %p36, 0, %s35
      %s38 = ssub.s32 %s26, %s33
      %p39 = scmp.eq.s32.totalorder %s38, 0
      %s41 = sadd.s32 %s40, 1
      %s42 = scalar_select %p39, %s40, %s41
      %p45 = pneg %p39
      %p46 = scmp.eq.s32.totalorder %s18, 1
      %p47 = por %p45, %p46
      %p48 = scmp.ne.s32.totalorder %s40, %s43
      %p49 = scmp.eq.s32.totalorder %s18, 0
      %p50 = por %p48, %p49
      %p51 = scmp.ne.s32.totalorder %s40, %s43
      %p52 = scmp.eq.s32.totalorder %s23, 1
      %p53 = por %p51, %p52
      %p54 = scmp.ne.s32.totalorder %s43, %s44
      %p55 = scmp.eq.s32.totalorder %s23, 0
      %p56 = por %p54, %p55
      %p57 = scmp.ne.s32.totalorder %s43, %s44
      %p58 = scmp.eq.s32.totalorder %s24, 1
      %p59 = por %p57, %p58
      %p61 = scmp.ne.s32.totalorder %s44, %s60
      %p62 = scmp.eq.s32.totalorder %s24, 0
      %p63 = por %p61, %p62
      %s64 = ssub.s32 %s26, %s33
      %p65 = scmp.eq.s32.totalorder %s64, 0
      %s67 = sadd.s32 %s66, 1
      %s68 = scalar_select %p65, %s66, %s67
      %p71 = pneg %p65
      %p72 = scmp.eq.s32.totalorder %s18, 1
      %p73 = por %p71, %p72
      %p74 = scmp.ne.s32.totalorder %s66, %s69
      %p75 = scmp.eq.s32.totalorder %s18, 0
      %p76 = por %p74, %p75
      %p77 = scmp.ne.s32.totalorder %s66, %s69
      %p78 = scmp.eq.s32.totalorder %s23, 1
      %p79 = por %p77, %p78
      %p80 = scmp.ne.s32.totalorder %s69, %s70
      %p81 = scmp.eq.s32.totalorder %s23, 0
      %p82 = por %p80, %p81
      %p83 = scmp.ne.s32.totalorder %s69, %s70
      %p84 = scmp.eq.s32.totalorder %s24, 1
      %p85 = por %p83, %p84
      %p87 = scmp.ne.s32.totalorder %s70, %s86
      %p88 = scmp.eq.s32.totalorder %s24, 0
      %p89 = por %p87, %p88
      %s90 = ssub.s32 %s25, %s37
      %p91 = scmp.eq.s32.totalorder %s90, 0
      %s93 = sadd.s32 %s92, 1
      %s94 = scalar_select %p91, %s92, %s93
      %p97 = pneg %p91
      %p98 = scmp.eq.s32.totalorder %s18, 1
      %p99 = por %p97, %p98
      %p100 = scmp.ne.s32.totalorder %s92, %s95
      %p101 = scmp.eq.s32.totalorder %s18, 0
      %p102 = por %p100, %p101
      %p103 = scmp.ne.s32.totalorder %s92, %s95
      %p104 = scmp.eq.s32.totalorder %s23, 1
      %p105 = por %p103, %p104
      %p106 = scmp.ne.s32.totalorder %s95, %s96
      %p107 = scmp.eq.s32.totalorder %s23, 0
      %p108 = por %p106, %p107
      %p109 = scmp.ne.s32.totalorder %s95, %s96
      %p110 = scmp.eq.s32.totalorder %s24, 1
      %p111 = por %p109, %p110
      %p113 = scmp.ne.s32.totalorder %s96, %s112
      %p114 = scmp.eq.s32.totalorder %s24, 0
      %p115 = por %p113, %p114
      %s116 = ssub.s32 %s26, %s33
      %s117 = ssub.s32 %s25, %s37
      %s118 = sor.u32 %s116, %s117
      %p119 = scmp.eq.s32.totalorder %s118, 0
      %s121 = sadd.s32 %s120, 1
      %s122 = scalar_select %p119, %s120, %s121
      %p125 = pneg %p119
      %p126 = scmp.eq.s32.totalorder %s18, 1
      %p127 = por %p125, %p126
      %p128 = scmp.ne.s32.totalorder %s120, %s123
      %p129 = scmp.eq.s32.totalorder %s18, 0
      %p130 = por %p128, %p129
      %p131 = scmp.ne.s32.totalorder %s120, %s123
      %p132 = scmp.eq.s32.totalorder %s23, 1
      %p133 = por %p131, %p132
      %p134 = scmp.ne.s32.totalorder %s123, %s124
      %p135 = scmp.eq.s32.totalorder %s23, 0
      %p136 = por %p134, %p135
      %p137 = scmp.ne.s32.totalorder %s123, %s124
      %p138 = scmp.eq.s32.totalorder %s24, 1
      %p139 = por %p137, %p138
      %p141 = scmp.ne.s32.totalorder %s124, %s140
      %p142 = scmp.eq.s32.totalorder %s24, 0
      %p143 = por %p141, %p142
      %p144 = scmp.le.s32.totalorder 1, %s18
      %p145 = scmp.lt.s32.totalorder %s18, 3
      %p146 = pnand %p144, %p145
      %p147 = pneg %p146
      // Predicated region
      $region9: #{tpu_custom_call.1} parent=5 // pred_check
        _
      $region10: #{tpu_custom_call.1} parent=5 // pred_check_branch
        %149 = sbr.rel (%p146) target = $region12
      $region11: #{tpu_custom_call.1} parent=5 // pred_region
        %s150 = ssub.s32 %s18, 1
        // Predicated region
        $region13: #{tpu_custom_call.1} parent=11 // pred_check
          %p151 = pneg %p108
        $region14: #{tpu_custom_call.1} parent=11 // pred_check_branch
          %153 = sbr.rel (%p151) target = $region16
        $region15: #{tpu_custom_call.1} parent=11 // pred_region
          %s154 = smul.u32 2, %s27
          %156 = vsyncadd [#allocation6], 0
          %s157 = smul.addr %s154, 8
          %s158 = scalar_lea.hbm %s2, %s157
          %s159 = sshll.u32 %s158, 4
          %s160 = int_to_ptr.hbm [resolvable:$true] %s159
          %s161 = sshll.u32 [#allocation7], 4
          %s162 = int_to_ptr.vmem [resolvable:$true] %s161
          %167 = dma.hbm_to_vmem [thread:$0]  %s160, 4096, %s162, [#allocation6], 256, 256, 16
        $region16: #{tpu_custom_call.1} parent=11 // pred_fallthru
          _
      $region12: #{tpu_custom_call.1} parent=5 // pred_fallthru
        _
      %p168 = scmp.lt.s32.totalorder %s18, 2
      // Predicated region
      $region17: #{tpu_custom_call.1} parent=5 // pred_check
        %p169 = pneg %p168
      $region18: #{tpu_custom_call.1} parent=5 // pred_check_branch
        %171 = sbr.rel (%p169) target = $region20
      $region19: #{tpu_custom_call.1} parent=5 // pred_region
        // Predicated region
        $region21: #{tpu_custom_call.1} parent=19 // pred_check
          %p172 = pneg %p50
        $region22: #{tpu_custom_call.1} parent=19 // pred_check_branch
          %174 = sbr.rel (%p172) target = $region24
        $region23: #{tpu_custom_call.1} parent=19 // pred_region
          %s175 = sand.u32 %s40, 1
          %s176 = scalar_lea.sflag [#allocation3], %s175
          %s177 = sand.u32 %s40, 1
          %s178 = smul.addr %s177, 24
          %s179 = scalar_lea.vmem [#allocation2], %s178
          %s180 = smul.u32 3, %s26
          %182 = vsyncadd %s176, 0
          %s183 = smul.addr %s180, 8
          %s184 = scalar_lea.hbm %s0, %s183
          %s185 = sshll.u32 %s184, 4
          %s186 = int_to_ptr.hbm [resolvable:$true] %s185
          %s187 = sshll.u32 %s179, 4
          %s188 = int_to_ptr.vmem [resolvable:$true] %s187
          %193 = dma.hbm_to_vmem [thread:$0]  %s186, 384, %s188, %s176, 128, 128, 8
        $region24: #{tpu_custom_call.1} parent=19 // pred_fallthru
          _
        // Predicated region
        $region25: #{tpu_custom_call.1} parent=19 // pred_check
          %p194 = pneg %p76
        $region26: #{tpu_custom_call.1} parent=19 // pred_check_branch
          %196 = sbr.rel (%p194) target = $region28
        $region27: #{tpu_custom_call.1} parent=19 // pred_region
          %s197 = sand.u32 %s18, 1
          %s198 = scalar_lea.sflag [#allocation6], %s197
          %s199 = sand.u32 %s66, 1
          %s200 = smul.addr %s199, 24
          %s201 = scalar_lea.vmem [#allocation5], %s200
          %s202 = smul.u32 3, %s26
          %204 = vsyncadd %s198, 0
          %s205 = smul.addr %s202, 8
          %s206 = scalar_lea.hbm %s1, %s205
          %s207 = sshll.u32 %s206, 4
          %s208 = int_to_ptr.hbm [resolvable:$true] %s207
          %s209 = sshll.u32 %s201, 4
          %s210 = int_to_ptr.vmem [resolvable:$true] %s209
          %215 = dma.hbm_to_vmem [thread:$0]  %s208, 384, %s210, %s198, 128, 128, 8
        $region28: #{tpu_custom_call.1} parent=19 // pred_fallthru
          _
      $region20: #{tpu_custom_call.1} parent=5 // pred_fallthru
        _
      %p216 = scmp.le.s32.totalorder 1, %s18
      %p217 = scmp.lt.s32.totalorder %s18, 3
      %p218 = pnand %p216, %p217
      %p219 = pneg %p218
      // Predicated region
      $region29: #{tpu_custom_call.1} parent=5 // pred_check
        _
      $region30: #{tpu_custom_call.1} parent=5 // pred_check_branch
        %221 = sbr.rel (%p218) target = $region32
      $region31: #{tpu_custom_call.1} parent=5 // pred_region
        %s222 = ssub.s32 %s18, 1
        %s223 = sand.u32 %s43, 1
        %s224 = scalar_lea.sflag [#allocation3], %s223
        %s225 = sand.u32 %s43, 1
        %s226 = smul.addr %s225, 24
        %s227 = scalar_lea.vmem [#allocation2], %s226
        // Predicated region
        $region33: #{tpu_custom_call.1} parent=31 // pred_check
          %p228 = pneg %p56
        $region34: #{tpu_custom_call.1} parent=31 // pred_check_branch
          %230 = sbr.rel (%p228) target = $region36
        $region35: #{tpu_custom_call.1} parent=31 // pred_region
          %232 = dma.done %s224, 384
        $region36: #{tpu_custom_call.1} parent=31 // pred_fallthru
          _
        %s233 = sand.u32 %s23, 1
        %s234 = scalar_lea.sflag [#allocation6], %s233
        %s235 = sand.u32 %s69, 1
        %s236 = smul.addr %s235, 24
        %s237 = scalar_lea.vmem [#allocation5], %s236
        // Predicated region
        $region37: #{tpu_custom_call.1} parent=31 // pred_check
          %p238 = pneg %p82
        $region38: #{tpu_custom_call.1} parent=31 // pred_check_branch
          %240 = sbr.rel (%p238) target = $region40
        $region39: #{tpu_custom_call.1} parent=31 // pred_region
          %242 = dma.done %s234, 384
        $region40: #{tpu_custom_call.1} parent=31 // pred_fallthru
          _
        // Predicated region
        $region41: #{tpu_custom_call.1} parent=31 // pred_check
          %p243 = pneg %p108
        $region42: #{tpu_custom_call.1} parent=31 // pred_check_branch
          %245 = sbr.rel (%p243) target = $region44
        $region43: #{tpu_custom_call.1} parent=31 // pred_region
          %247 = dma.done [#allocation6], 4096
        $region44: #{tpu_custom_call.1} parent=31 // pred_fallthru
          _
        %s248 = sand.u32 %s43, 1
        %s249 = scalar_lea.sflag [#allocation3], %s248
        %s250 = sand.u32 %s43, 1
        %s251 = smul.addr %s250, 24
        %s252 = scalar_lea.vmem [#allocation2], %s251
        %p253 = pneg %p56
        %p254 = pneg %p53
        %s255 = sand.u32 %s23, 1
        %s256 = scalar_lea.sflag [#allocation6], %s255
        %s257 = sand.u32 %s69, 1
        %s258 = smul.addr %s257, 24
        %s259 = scalar_lea.vmem [#allocation5], %s258
        %p260 = pneg %p82
        %p261 = pneg %p79
        %p262 = pneg %p108
        %p263 = pneg %p105
        %p264 = pneg %p136
        %p265 = pneg %p133
        %s266 = sand.u32 %s123, 1
        %s267 = scalar_lea.sflag [#allocation4], %s266
        %s268 = sand.u32 %s123, 1
        %s269 = smul.addr %s268, 16
        %s270 = scalar_lea.vmem [#allocation8], %s269
        %s271 = smul.u32 3, %s28
        %s272 = smul.u32 3, %s28
        %s273 = smul.u32 2, %s27
        %s274 = smul.u32 2, %s27
        %v275 = vld [vmem:[#allocation7] sm:$0xff]
        %v276 = vld [vmem:[#allocation7 + $0x8] sm:$0xff]
        %v277 = vld [vmem:[#allocation7 + $0x10] sm:$0xff]
        %v278 = vld [vmem:[#allocation7 + $0x18] sm:$0xff]
        %v279 = vld [vmem:[#allocation7 + $0x20] sm:$0xff]
        %v280 = vld [vmem:[#allocation7 + $0x28] sm:$0xff]
        %v281 = vld [vmem:[#allocation7 + $0x30] sm:$0xff]
        %v282 = vld [vmem:[#allocation7 + $0x38] sm:$0xff]
        %v283 = vld [vmem:[#allocation7 + $0x40] sm:$0xff]
        %v284 = vld [vmem:[#allocation7 + $0x48] sm:$0xff]
        %v285 = vld [vmem:[#allocation7 + $0x50] sm:$0xff]
        %v286 = vld [vmem:[#allocation7 + $0x58] sm:$0xff]
        %v287 = vld [vmem:[#allocation7 + $0x60] sm:$0xff]
        %v288 = vld [vmem:[#allocation7 + $0x68] sm:$0xff]
        %v289 = vld [vmem:[#allocation7 + $0x70] sm:$0xff]
        %v290 = vld [vmem:[#allocation7 + $0x78] sm:$0xff]
        %v291 = vld [vmem:[#allocation7 + $0x80] sm:$0xff]
        %v292 = vld [vmem:[#allocation7 + $0x88] sm:$0xff]
        %v293 = vld [vmem:[#allocation7 + $0x90] sm:$0xff]
        %v294 = vld [vmem:[#allocation7 + $0x98] sm:$0xff]
        %v295 = vld [vmem:[#allocation7 + $0xa0] sm:$0xff]
        %v296 = vld [vmem:[#allocation7 + $0xa8] sm:$0xff]
        %v297 = vld [vmem:[#allocation7 + $0xb0] sm:$0xff]
        %v298 = vld [vmem:[#allocation7 + $0xb8] sm:$0xff]
        %v299 = vld [vmem:[#allocation7 + $0xc0] sm:$0xff]
        %v300 = vld [vmem:[#allocation7 + $0xc8] sm:$0xff]
        %v301 = vld [vmem:[#allocation7 + $0xd0] sm:$0xff]
        %v302 = vld [vmem:[#allocation7 + $0xd8] sm:$0xff]
        %v303 = vld [vmem:[#allocation7 + $0xe0] sm:$0xff]
        %v304 = vld [vmem:[#allocation7 + $0xe8] sm:$0xff]
        %v305 = vld [vmem:[#allocation7 + $0xf0] sm:$0xff]
        %v306 = vld [vmem:[#allocation7 + $0xf8] sm:$0xff]
        %v307 = vld [vmem:[%s227] sm:$0xff]
        %v308 = vld [vmem:[%s227 + $0x8] sm:$0xff]
        %v309 = vld [vmem:[%s227 + $0x10] sm:$0xff]
        %v310 = vand.u32 %v305, 4294901760
        %311 = vmatpush.msra.mxu0 %v310
        %v312 = vand.u32 %v303, 4294901760
        %313 = vmatpush.msra.mxu0 %v312
        %v314 = vand.u32 %v301, 4294901760
        %315 = vmatpush.msra.mxu0 %v314
        %v316 = vand.u32 %v299, 4294901760
        %317 = vmatpush.msra.mxu0 %v316
        %v318 = vand.u32 %v297, 4294901760
        %319 = vmatpush.msra.mxu0 %v318
        %v320 = vand.u32 %v295, 4294901760
        %321 = vmatpush.msra.mxu0 %v320
        %v322 = vand.u32 %v293, 4294901760
        %323 = vmatpush.msra.mxu0 %v322
        %v324 = vand.u32 %v291, 4294901760
        %325 = vmatpush.msra.mxu0 %v324
        %v326 = vand.u32 %v289, 4294901760
        %327 = vmatpush.msra.mxu0 %v326
        %v328 = vand.u32 %v287, 4294901760
        %329 = vmatpush.msra.mxu0 %v328
        %v330 = vand.u32 %v285, 4294901760
        %331 = vmatpush.msra.mxu0 %v330
        %v332 = vand.u32 %v283, 4294901760
        %333 = vmatpush.msra.mxu0 %v332
        %v334 = vand.u32 %v281, 4294901760
        %335 = vmatpush.msra.mxu0 %v334
        %v336 = vand.u32 %v279, 4294901760
        %337 = vmatpush.msra.mxu0 %v336
        %v338 = vand.u32 %v277, 4294901760
        %339 = vmatpush.msra.mxu0 %v338
        %v340 = vand.u32 %v275, 4294901760
        %341 = vmatpush.msra.mxu0 %v340
        %v342 = vand.u32 %v307, 4294901760
        %v343 = vsub.f32 %v307, %v342
        %v344 = vand.u32 %v343, 4294901760
        %v345 = vsub.f32 %v343, %v344
        %v346 = vand.u32 %v345, 4294901760
        %347 = vmatmul.f32.gmra.mxu0 %v346
        %v348 = vpop.f32.mrf.mxu0
        %v349 = vadd.f32 0.0, %v348
        %v350 = vand.u32 %v308, 4294901760
        %v351 = vsub.f32 %v308, %v350
        %v352 = vand.u32 %v351, 4294901760
        %v353 = vsub.f32 %v351, %v352
        %v354 = vand.u32 %v353, 4294901760
        %355 = vmatmul.f32.gmra.mxu0 %v354
        %v356 = vpop.f32.mrf.mxu0
        %v357 = vadd.f32 0.0, %v356
        %v358 = vand.u32 %v309, 4294901760
        %v359 = vsub.f32 %v309, %v358
        %v360 = vand.u32 %v359, 4294901760
        %v361 = vsub.f32 %v359, %v360
        %v362 = vand.u32 %v361, 4294901760
        %363 = vmatmul.f32.gmra.mxu0 %v362
        %v364 = vpop.f32.mrf.mxu0
        %v365 = vadd.f32 0.0, %v364
        %366 = vdwg.mxu0
        %v367 = vand.u32 %v305, 4294901760
        %v368 = vsub.f32 %v305, %v367
        %v369 = vand.u32 %v368, 4294901760
        %v370 = vsub.f32 %v368, %v369
        %v371 = vand.u32 %v370, 4294901760
        %372 = vmatpush.msra.mxu0 %v371
        %v373 = vand.u32 %v303, 4294901760
        %v374 = vsub.f32 %v303, %v373
        %v375 = vand.u32 %v374, 4294901760
        %v376 = vsub.f32 %v374, %v375
        %v377 = vand.u32 %v376, 4294901760
        %378 = vmatpush.msra.mxu0 %v377
        %v379 = vand.u32 %v301, 4294901760
        %v380 = vsub.f32 %v301, %v379
        %v381 = vand.u32 %v380, 4294901760
        %v382 = vsub.f32 %v380, %v381
        %v383 = vand.u32 %v382, 4294901760
        %384 = vmatpush.msra.mxu0 %v383
        %v385 = vand.u32 %v299, 4294901760
        %v386 = vsub.f32 %v299, %v385
        %v387 = vand.u32 %v386, 4294901760
        %v388 = vsub.f32 %v386, %v387
        %v389 = vand.u32 %v388, 4294901760
        %390 = vmatpush.msra.mxu0 %v389
        %v391 = vand.u32 %v297, 4294901760
        %v392 = vsub.f32 %v297, %v391
        %v393 = vand.u32 %v392, 4294901760
        %v394 = vsub.f32 %v392, %v393
        %v395 = vand.u32 %v394, 4294901760
        %396 = vmatpush.msra.mxu0 %v395
        %v397 = vand.u32 %v295, 4294901760
        %v398 = vsub.f32 %v295, %v397
        %v399 = vand.u32 %v398, 4294901760
        %v400 = vsub.f32 %v398, %v399
        %v401 = vand.u32 %v400, 4294901760
        %402 = vmatpush.msra.mxu0 %v401
        %v403 = vand.u32 %v293, 4294901760
        %v404 = vsub.f32 %v293, %v403
        %v405 = vand.u32 %v404, 4294901760
        %v406 = vsub.f32 %v404, %v405
        %v407 = vand.u32 %v406, 4294901760
        %408 = vmatpush.msra.mxu0 %v407
        %v409 = vand.u32 %v291, 4294901760
        %v410 = vsub.f32 %v291, %v409
        %v411 = vand.u32 %v410, 4294901760
        %v412 = vsub.f32 %v410, %v411
        %v413 = vand.u32 %v412, 4294901760
        %414 = vmatpush.msra.mxu0 %v413
        %v415 = vand.u32 %v289, 4294901760
        %v416 = vsub.f32 %v289, %v415
        %v417 = vand.u32 %v416, 4294901760
        %v418 = vsub.f32 %v416, %v417
        %v419 = vand.u32 %v418, 4294901760
        %420 = vmatpush.msra.mxu0 %v419
        %v421 = vand.u32 %v287, 4294901760
        %v422 = vsub.f32 %v287, %v421
        %v423 = vand.u32 %v422, 4294901760
        %v424 = vsub.f32 %v422, %v423
        %v425 = vand.u32 %v424, 4294901760
        %426 = vmatpush.msra.mxu0 %v425
        %v427 = vand.u32 %v285, 4294901760
        %v428 = vsub.f32 %v285, %v427
        %v429 = vand.u32 %v428, 4294901760
        %v430 = vsub.f32 %v428, %v429
        %v431 = vand.u32 %v430, 4294901760
        %432 = vmatpush.msra.mxu0 %v431
        %v433 = vand.u32 %v283, 4294901760
        %v434 = vsub.f32 %v283, %v433
        %v435 = vand.u32 %v434, 4294901760
        %v436 = vsub.f32 %v434, %v435
        %v437 = vand.u32 %v436, 4294901760
        %438 = vmatpush.msra.mxu0 %v437
        %v439 = vand.u32 %v281, 4294901760
        %v440 = vsub.f32 %v281, %v439
        %v441 = vand.u32 %v440, 4294901760
        %v442 = vsub.f32 %v440, %v441
        %v443 = vand.u32 %v442, 4294901760
        %444 = vmatpush.msra.mxu0 %v443
        %v445 = vand.u32 %v279, 4294901760
        %v446 = vsub.f32 %v279, %v445
        %v447 = vand.u32 %v446, 4294901760
        %v448 = vsub.f32 %v446, %v447
        %v449 = vand.u32 %v448, 4294901760
        %450 = vmatpush.msra.mxu0 %v449
        %v451 = vand.u32 %v277, 4294901760
        %v452 = vsub.f32 %v277, %v451
        %v453 = vand.u32 %v452, 4294901760
        %v454 = vsub.f32 %v452, %v453
        %v455 = vand.u32 %v454, 4294901760
        %456 = vmatpush.msra.mxu0 %v455
        %v457 = vand.u32 %v275, 4294901760
        %v458 = vsub.f32 %v275, %v457
        %v459 = vand.u32 %v458, 4294901760
        %v460 = vsub.f32 %v458, %v459
        %v461 = vand.u32 %v460, 4294901760
        %462 = vmatpush.msra.mxu0 %v461
        %v463 = vand.u32 %v307, 4294901760
        %464 = vmatmul.f32.gmra.mxu0 %v463
        %v465 = vpop.f32.mrf.mxu0
        %v466 = vadd.f32 %v349, %v465
        %v467 = vand.u32 %v308, 4294901760
        %468 = vmatmul.f32.gmra.mxu0 %v467
        %v469 = vpop.f32.mrf.mxu0
        %v470 = vadd.f32 %v357, %v469
        %v471 = vand.u32 %v309, 4294901760
        %472 = vmatmul.f32.gmra.mxu0 %v471
        %v473 = vpop.f32.mrf.mxu0
        %v474 = vadd.f32 %v365, %v473
        %475 = vdwg.mxu0
        %v476 = vand.u32 %v305, 4294901760
        %v477 = vsub.f32 %v305, %v476
        %478 = vmatpush.msra.mxu0 %v477
        %v479 = vand.u32 %v303, 4294901760
        %v480 = vsub.f32 %v303, %v479
        %481 = vmatpush.msra.mxu0 %v480
        %v482 = vand.u32 %v301, 4294901760
        %v483 = vsub.f32 %v301, %v482
        %484 = vmatpush.msra.mxu0 %v483
        %v485 = vand.u32 %v299, 4294901760
        %v486 = vsub.f32 %v299, %v485
        %487 = vmatpush.msra.mxu0 %v486
        %v488 = vand.u32 %v297, 4294901760
        %v489 = vsub.f32 %v297, %v488
        %490 = vmatpush.msra.mxu0 %v489
        %v491 = vand.u32 %v295, 4294901760
        %v492 = vsub.f32 %v295, %v491
        %493 = vmatpush.msra.mxu0 %v492
        %v494 = vand.u32 %v293, 4294901760
        %v495 = vsub.f32 %v293, %v494
        %496 = vmatpush.msra.mxu0 %v495
        %v497 = vand.u32 %v291, 4294901760
        %v498 = vsub.f32 %v291, %v497
        %499 = vmatpush.msra.mxu0 %v498
        %v500 = vand.u32 %v289, 4294901760
        %v501 = vsub.f32 %v289, %v500
        %502 = vmatpush.msra.mxu0 %v501
        %v503 = vand.u32 %v287, 4294901760
        %v504 = vsub.f32 %v287, %v503
        %505 = vmatpush.msra.mxu0 %v504
        %v506 = vand.u32 %v285, 4294901760
        %v507 = vsub.f32 %v285, %v506
        %508 = vmatpush.msra.mxu0 %v507
        %v509 = vand.u32 %v283, 4294901760
        %v510 = vsub.f32 %v283, %v509
        %511 = vmatpush.msra.mxu0 %v510
        %v512 = vand.u32 %v281, 4294901760
        %v513 = vsub.f32 %v281, %v512
        %514 = vmatpush.msra.mxu0 %v513
        %v515 = vand.u32 %v279, 4294901760
        %v516 = vsub.f32 %v279, %v515
        %517 = vmatpush.msra.mxu0 %v516
        %v518 = vand.u32 %v277, 4294901760
        %v519 = vsub.f32 %v277, %v518
        %520 = vmatpush.msra.mxu0 %v519
        %v521 = vand.u32 %v275, 4294901760
        %v522 = vsub.f32 %v275, %v521
        %523 = vmatpush.msra.mxu0 %v522
        %v524 = vand.u32 %v307, 4294901760
        %v525 = vsub.f32 %v307, %v524
        %526 = vmatmul.f32.gmra.mxu0 %v525
        %v527 = vpop.f32.mrf.mxu0
        %v528 = vadd.f32 %v466, %v527
        %v529 = vand.u32 %v308, 4294901760
        %v530 = vsub.f32 %v308, %v529
        %531 = vmatmul.f32.gmra.mxu0 %v530
        %v532 = vpop.f32.mrf.mxu0
        %v533 = vadd.f32 %v470, %v532
        %v534 = vand.u32 %v309, 4294901760
        %v535 = vsub.f32 %v309, %v534
        %536 = vmatmul.f32.gmra.mxu0 %v535
        %v537 = vpop.f32.mrf.mxu0
        %v538 = vadd.f32 %v474, %v537
        %539 = vdwg.mxu0
        %v540 = vand.u32 %v305, 4294901760
        %541 = vmatpush.msra.mxu0 %v540
        %v542 = vand.u32 %v303, 4294901760
        %543 = vmatpush.msra.mxu0 %v542
        %v544 = vand.u32 %v301, 4294901760
        %545 = vmatpush.msra.mxu0 %v544
        %v546 = vand.u32 %v299, 4294901760
        %547 = vmatpush.msra.mxu0 %v546
        %v548 = vand.u32 %v297, 4294901760
        %549 = vmatpush.msra.mxu0 %v548
        %v550 = vand.u32 %v295, 4294901760
        %551 = vmatpush.msra.mxu0 %v550
        %v552 = vand.u32 %v293, 4294901760
        %553 = vmatpush.msra.mxu0 %v552
        %v554 = vand.u32 %v291, 4294901760
        %555 = vmatpush.msra.mxu0 %v554
        %v556 = vand.u32 %v289, 4294901760
        %557 = vmatpush.msra.mxu0 %v556
        %v558 = vand.u32 %v287, 4294901760
        %559 = vmatpush.msra.mxu0 %v558
        %v560 = vand.u32 %v285, 4294901760
        %561 = vmatpush.msra.mxu0 %v560
        %v562 = vand.u32 %v283, 4294901760
        %563 = vmatpush.msra.mxu0 %v562
        %v564 = vand.u32 %v281, 4294901760
        %565 = vmatpush.msra.mxu0 %v564
        %v566 = vand.u32 %v279, 4294901760
        %567 = vmatpush.msra.mxu0 %v566
        %v568 = vand.u32 %v277, 4294901760
        %569 = vmatpush.msra.mxu0 %v568
        %v570 = vand.u32 %v275, 4294901760
        %571 = vmatpush.msra.mxu0 %v570
        %v572 = vand.u32 %v307, 4294901760
        %v573 = vsub.f32 %v307, %v572
        %v574 = vand.u32 %v573, 4294901760
        %575 = vmatmul.f32.gmra.mxu0 %v574
        %v576 = vpop.f32.mrf.mxu0
        %v577 = vadd.f32 %v528, %v576
        %v578 = vand.u32 %v308, 4294901760
        %v579 = vsub.f32 %v308, %v578
        %v580 = vand.u32 %v579, 4294901760
        %581 = vmatmul.f32.gmra.mxu0 %v580
        %v582 = vpop.f32.mrf.mxu0
        %v583 = vadd.f32 %v533, %v582
        %v584 = vand.u32 %v309, 4294901760
        %v585 = vsub.f32 %v309, %v584
        %v586 = vand.u32 %v585, 4294901760
        %587 = vmatmul.f32.gmra.mxu0 %v586
        %v588 = vpop.f32.mrf.mxu0
        %v589 = vadd.f32 %v538, %v588
        %590 = vdwg.mxu0
        %v591 = vand.u32 %v305, 4294901760
        %v592 = vsub.f32 %v305, %v591
        %v593 = vand.u32 %v592, 4294901760
        %594 = vmatpush.msra.mxu0 %v593
        %v595 = vand.u32 %v303, 4294901760
        %v596 = vsub.f32 %v303, %v595
        %v597 = vand.u32 %v596, 4294901760
        %598 = vmatpush.msra.mxu0 %v597
        %v599 = vand.u32 %v301, 4294901760
        %v600 = vsub.f32 %v301, %v599
        %v601 = vand.u32 %v600, 4294901760
        %602 = vmatpush.msra.mxu0 %v601
        %v603 = vand.u32 %v299, 4294901760
        %v604 = vsub.f32 %v299, %v603
        %v605 = vand.u32 %v604, 4294901760
        %606 = vmatpush.msra.mxu0 %v605
        %v607 = vand.u32 %v297, 4294901760
        %v608 = vsub.f32 %v297, %v607
        %v609 = vand.u32 %v608, 4294901760
        %610 = vmatpush.msra.mxu0 %v609
        %v611 = vand.u32 %v295, 4294901760
        %v612 = vsub.f32 %v295, %v611
        %v613 = vand.u32 %v612, 4294901760
        %614 = vmatpush.msra.mxu0 %v613
        %v615 = vand.u32 %v293, 4294901760
        %v616 = vsub.f32 %v293, %v615
        %v617 = vand.u32 %v616, 4294901760
        %618 = vmatpush.msra.mxu0 %v617
        %v619 = vand.u32 %v291, 4294901760
        %v620 = vsub.f32 %v291, %v619
        %v621 = vand.u32 %v620, 4294901760
        %622 = vmatpush.msra.mxu0 %v621
        %v623 = vand.u32 %v289, 4294901760
        %v624 = vsub.f32 %v289, %v623
        %v625 = vand.u32 %v624, 4294901760
        %626 = vmatpush.msra.mxu0 %v625
        %v627 = vand.u32 %v287, 4294901760
        %v628 = vsub.f32 %v287, %v627
        %v629 = vand.u32 %v628, 4294901760
        %630 = vmatpush.msra.mxu0 %v629
        %v631 = vand.u32 %v285, 4294901760
        %v632 = vsub.f32 %v285, %v631
        %v633 = vand.u32 %v632, 4294901760
        %634 = vmatpush.msra.mxu0 %v633
        %v635 = vand.u32 %v283, 4294901760
        %v636 = vsub.f32 %v283, %v635
        %v637 = vand.u32 %v636, 4294901760
        %638 = vmatpush.msra.mxu0 %v637
        %v639 = vand.u32 %v281, 4294901760
        %v640 = vsub.f32 %v281, %v639
        %v641 = vand.u32 %v640, 4294901760
        %642 = vmatpush.msra.mxu0 %v641
        %v643 = vand.u32 %v279, 4294901760
        %v644 = vsub.f32 %v279, %v643
        %v645 = vand.u32 %v644, 4294901760
        %646 = vmatpush.msra.mxu0 %v645
        %v647 = vand.u32 %v277, 4294901760
        %v648 = vsub.f32 %v277, %v647
        %v649 = vand.u32 %v648, 4294901760
        %650 = vmatpush.msra.mxu0 %v649
        %v651 = vand.u32 %v275, 4294901760
        %v652 = vsub.f32 %v275, %v651
        %v653 = vand.u32 %v652, 4294901760
        %654 = vmatpush.msra.mxu0 %v653
        %v655 = vand.u32 %v307, 4294901760
        %656 = vmatmul.f32.gmra.mxu0 %v655
        %v657 = vpop.f32.mrf.mxu0
        %v658 = vadd.f32 %v577, %v657
        %v659 = vand.u32 %v308, 4294901760
        %660 = vmatmul.f32.gmra.mxu0 %v659
        %v661 = vpop.f32.mrf.mxu0
        %v662 = vadd.f32 %v583, %v661
        %v663 = vand.u32 %v309, 4294901760
        %664 = vmatmul.f32.gmra.mxu0 %v663
        %v665 = vpop.f32.mrf.mxu0
        %v666 = vadd.f32 %v589, %v665
        %667 = vdwg.mxu0
        %v668 = vand.u32 %v305, 4294901760
        %669 = vmatpush.msra.mxu0 %v668
        %v670 = vand.u32 %v303, 4294901760
        %671 = vmatpush.msra.mxu0 %v670
        %v672 = vand.u32 %v301, 4294901760
        %673 = vmatpush.msra.mxu0 %v672
        %v674 = vand.u32 %v299, 4294901760
        %675 = vmatpush.msra.mxu0 %v674
        %v676 = vand.u32 %v297, 4294901760
        %677 = vmatpush.msra.mxu0 %v676
        %v678 = vand.u32 %v295, 4294901760
        %679 = vmatpush.msra.mxu0 %v678
        %v680 = vand.u32 %v293, 4294901760
        %681 = vmatpush.msra.mxu0 %v680
        %v682 = vand.u32 %v291, 4294901760
        %683 = vmatpush.msra.mxu0 %v682
        %v684 = vand.u32 %v289, 4294901760
        %685 = vmatpush.msra.mxu0 %v684
        %v686 = vand.u32 %v287, 4294901760
        %687 = vmatpush.msra.mxu0 %v686
        %v688 = vand.u32 %v285, 4294901760
        %689 = vmatpush.msra.mxu0 %v688
        %v690 = vand.u32 %v283, 4294901760
        %691 = vmatpush.msra.mxu0 %v690
        %v692 = vand.u32 %v281, 4294901760
        %693 = vmatpush.msra.mxu0 %v692
        %v694 = vand.u32 %v279, 4294901760
        %695 = vmatpush.msra.mxu0 %v694
        %v696 = vand.u32 %v277, 4294901760
        %697 = vmatpush.msra.mxu0 %v696
        %v698 = vand.u32 %v275, 4294901760
        %699 = vmatpush.msra.mxu0 %v698
        %v700 = vand.u32 %v307, 4294901760
        %701 = vmatmul.f32.gmra.mxu0 %v700
        %v702 = vpop.f32.mrf.mxu0
        %v703 = vadd.f32 %v658, %v702
        %v704 = vand.u32 %v308, 4294901760
        %705 = vmatmul.f32.gmra.mxu0 %v704
        %v706 = vpop.f32.mrf.mxu0
        %v707 = vadd.f32 %v662, %v706
        %v708 = vand.u32 %v309, 4294901760
        %709 = vmatmul.f32.gmra.mxu0 %v708
        %v710 = vpop.f32.mrf.mxu0
        %v711 = vadd.f32 %v666, %v710
        %712 = vdwg.mxu0
        %v713 = vand.u32 %v306, 4294901760
        %714 = vmatpush.msra.mxu0 %v713
        %v715 = vand.u32 %v304, 4294901760
        %716 = vmatpush.msra.mxu0 %v715
        %v717 = vand.u32 %v302, 4294901760
        %718 = vmatpush.msra.mxu0 %v717
        %v719 = vand.u32 %v300, 4294901760
        %720 = vmatpush.msra.mxu0 %v719
        %v721 = vand.u32 %v298, 4294901760
        %722 = vmatpush.msra.mxu0 %v721
        %v723 = vand.u32 %v296, 4294901760
        %724 = vmatpush.msra.mxu0 %v723
        %v725 = vand.u32 %v294, 4294901760
        %726 = vmatpush.msra.mxu0 %v725
        %v727 = vand.u32 %v292, 4294901760
        %728 = vmatpush.msra.mxu0 %v727
        %v729 = vand.u32 %v290, 4294901760
        %730 = vmatpush.msra.mxu0 %v729
        %v731 = vand.u32 %v288, 4294901760
        %732 = vmatpush.msra.mxu0 %v731
        %v733 = vand.u32 %v286, 4294901760
        %734 = vmatpush.msra.mxu0 %v733
        %v735 = vand.u32 %v284, 4294901760
        %736 = vmatpush.msra.mxu0 %v735
        %v737 = vand.u32 %v282, 4294901760
        %738 = vmatpush.msra.mxu0 %v737
        %v739 = vand.u32 %v280, 4294901760
        %740 = vmatpush.msra.mxu0 %v739
        %v741 = vand.u32 %v278, 4294901760
        %742 = vmatpush.msra.mxu0 %v741
        %v743 = vand.u32 %v276, 4294901760
        %744 = vmatpush.msra.mxu0 %v743
        %v745 = vand.u32 %v307, 4294901760
        %v746 = vsub.f32 %v307, %v745
        %v747 = vand.u32 %v746, 4294901760
        %v748 = vsub.f32 %v746, %v747
        %v749 = vand.u32 %v748, 4294901760
        %750 = vmatmul.f32.gmra.mxu0 %v749
        %v751 = vpop.f32.mrf.mxu0
        %v752 = vadd.f32 0.0, %v751
        %v753 = vand.u32 %v308, 4294901760
        %v754 = vsub.f32 %v308, %v753
        %v755 = vand.u32 %v754, 4294901760
        %v756 = vsub.f32 %v754, %v755
        %v757 = vand.u32 %v756, 4294901760
        %758 = vmatmul.f32.gmra.mxu0 %v757
        %v759 = vpop.f32.mrf.mxu0
        %v760 = vadd.f32 0.0, %v759
        %v761 = vand.u32 %v309, 4294901760
        %v762 = vsub.f32 %v309, %v761
        %v763 = vand.u32 %v762, 4294901760
        %v764 = vsub.f32 %v762, %v763
        %v765 = vand.u32 %v764, 4294901760
        %766 = vmatmul.f32.gmra.mxu0 %v765
        %v767 = vpop.f32.mrf.mxu0
        %v768 = vadd.f32 0.0, %v767
        %769 = vdwg.mxu0
        %v770 = vand.u32 %v306, 4294901760
        %v771 = vsub.f32 %v306, %v770
        %v772 = vand.u32 %v771, 4294901760
        %v773 = vsub.f32 %v771, %v772
        %v774 = vand.u32 %v773, 4294901760
        %775 = vmatpush.msra.mxu0 %v774
        %v776 = vand.u32 %v304, 4294901760
        %v777 = vsub.f32 %v304, %v776
        %v778 = vand.u32 %v777, 4294901760
        %v779 = vsub.f32 %v777, %v778
        %v780 = vand.u32 %v779, 4294901760
        %781 = vmatpush.msra.mxu0 %v780
        %v782 = vand.u32 %v302, 4294901760
        %v783 = vsub.f32 %v302, %v782
        %v784 = vand.u32 %v783, 4294901760
        %v785 = vsub.f32 %v783, %v784
        %v786 = vand.u32 %v785, 4294901760
        %787 = vmatpush.msra.mxu0 %v786
        %v788 = vand.u32 %v300, 4294901760
        %v789 = vsub.f32 %v300, %v788
        %v790 = vand.u32 %v789, 4294901760
        %v791 = vsub.f32 %v789, %v790
        %v792 = vand.u32 %v791, 4294901760
        %793 = vmatpush.msra.mxu0 %v792
        %v794 = vand.u32 %v298, 4294901760
        %v795 = vsub.f32 %v298, %v794
        %v796 = vand.u32 %v795, 4294901760
        %v797 = vsub.f32 %v795, %v796
        %v798 = vand.u32 %v797, 4294901760
        %799 = vmatpush.msra.mxu0 %v798
        %v800 = vand.u32 %v296, 4294901760
        %v801 = vsub.f32 %v296, %v800
        %v802 = vand.u32 %v801, 4294901760
        %v803 = vsub.f32 %v801, %v802
        %v804 = vand.u32 %v803, 4294901760
        %805 = vmatpush.msra.mxu0 %v804
        %v806 = vand.u32 %v294, 4294901760
        %v807 = vsub.f32 %v294, %v806
        %v808 = vand.u32 %v807, 4294901760
        %v809 = vsub.f32 %v807, %v808
        %v810 = vand.u32 %v809, 4294901760
        %811 = vmatpush.msra.mxu0 %v810
        %v812 = vand.u32 %v292, 4294901760
        %v813 = vsub.f32 %v292, %v812
        %v814 = vand.u32 %v813, 4294901760
        %v815 = vsub.f32 %v813, %v814
        %v816 = vand.u32 %v815, 4294901760
        %817 = vmatpush.msra.mxu0 %v816
        %v818 = vand.u32 %v290, 4294901760
        %v819 = vsub.f32 %v290, %v818
        %v820 = vand.u32 %v819, 4294901760
        %v821 = vsub.f32 %v819, %v820
        %v822 = vand.u32 %v821, 4294901760
        %823 = vmatpush.msra.mxu0 %v822
        %v824 = vand.u32 %v288, 4294901760
        %v825 = vsub.f32 %v288, %v824
        %v826 = vand.u32 %v825, 4294901760
        %v827 = vsub.f32 %v825, %v826
        %v828 = vand.u32 %v827, 4294901760
        %829 = vmatpush.msra.mxu0 %v828
        %v830 = vand.u32 %v286, 4294901760
        %v831 = vsub.f32 %v286, %v830
        %v832 = vand.u32 %v831, 4294901760
        %v833 = vsub.f32 %v831, %v832
        %v834 = vand.u32 %v833, 4294901760
        %835 = vmatpush.msra.mxu0 %v834
        %v836 = vand.u32 %v284, 4294901760
        %v837 = vsub.f32 %v284, %v836
        %v838 = vand.u32 %v837, 4294901760
        %v839 = vsub.f32 %v837, %v838
        %v840 = vand.u32 %v839, 4294901760
        %841 = vmatpush.msra.mxu0 %v840
        %v842 = vand.u32 %v282, 4294901760
        %v843 = vsub.f32 %v282, %v842
        %v844 = vand.u32 %v843, 4294901760
        %v845 = vsub.f32 %v843, %v844
        %v846 = vand.u32 %v845, 4294901760
        %847 = vmatpush.msra.mxu0 %v846
        %v848 = vand.u32 %v280, 4294901760
        %v849 = vsub.f32 %v280, %v848
        %v850 = vand.u32 %v849, 4294901760
        %v851 = vsub.f32 %v849, %v850
        %v852 = vand.u32 %v851, 4294901760
        %853 = vmatpush.msra.mxu0 %v852
        %v854 = vand.u32 %v278, 4294901760
        %v855 = vsub.f32 %v278, %v854
        %v856 = vand.u32 %v855, 4294901760
        %v857 = vsub.f32 %v855, %v856
        %v858 = vand.u32 %v857, 4294901760
        %859 = vmatpush.msra.mxu0 %v858
        %v860 = vand.u32 %v276, 4294901760
        %v861 = vsub.f32 %v276, %v860
        %v862 = vand.u32 %v861, 4294901760
        %v863 = vsub.f32 %v861, %v862
        %v864 = vand.u32 %v863, 4294901760
        %865 = vmatpush.msra.mxu0 %v864
        %v866 = vand.u32 %v307, 4294901760
        %867 = vmatmul.f32.gmra.mxu0 %v866
        %v868 = vpop.f32.mrf.mxu0
        %v869 = vadd.f32 %v752, %v868
        %v870 = vand.u32 %v308, 4294901760
        %871 = vmatmul.f32.gmra.mxu0 %v870
        %v872 = vpop.f32.mrf.mxu0
        %v873 = vadd.f32 %v760, %v872
        %v874 = vand.u32 %v309, 4294901760
        %875 = vmatmul.f32.gmra.mxu0 %v874
        %v876 = vpop.f32.mrf.mxu0
        %v877 = vadd.f32 %v768, %v876
        %878 = vdwg.mxu0
        %v879 = vand.u32 %v306, 4294901760
        %v880 = vsub.f32 %v306, %v879
        %881 = vmatpush.msra.mxu0 %v880
        %v882 = vand.u32 %v304, 4294901760
        %v883 = vsub.f32 %v304, %v882
        %884 = vmatpush.msra.mxu0 %v883
        %v885 = vand.u32 %v302, 4294901760
        %v886 = vsub.f32 %v302, %v885
        %887 = vmatpush.msra.mxu0 %v886
        %v888 = vand.u32 %v300, 4294901760
        %v889 = vsub.f32 %v300, %v888
        %890 = vmatpush.msra.mxu0 %v889
        %v891 = vand.u32 %v298, 4294901760
        %v892 = vsub.f32 %v298, %v891
        %893 = vmatpush.msra.mxu0 %v892
        %v894 = vand.u32 %v296, 4294901760
        %v895 = vsub.f32 %v296, %v894
        %896 = vmatpush.msra.mxu0 %v895
        %v897 = vand.u32 %v294, 4294901760
        %v898 = vsub.f32 %v294, %v897
        %899 = vmatpush.msra.mxu0 %v898
        %v900 = vand.u32 %v292, 4294901760
        %v901 = vsub.f32 %v292, %v900
        %902 = vmatpush.msra.mxu0 %v901
        %v903 = vand.u32 %v290, 4294901760
        %v904 = vsub.f32 %v290, %v903
        %905 = vmatpush.msra.mxu0 %v904
        %v906 = vand.u32 %v288, 4294901760
        %v907 = vsub.f32 %v288, %v906
        %908 = vmatpush.msra.mxu0 %v907
        %v909 = vand.u32 %v286, 4294901760
        %v910 = vsub.f32 %v286, %v909
        %911 = vmatpush.msra.mxu0 %v910
        %v912 = vand.u32 %v284, 4294901760
        %v913 = vsub.f32 %v284, %v912
        %914 = vmatpush.msra.mxu0 %v913
        %v915 = vand.u32 %v282, 4294901760
        %v916 = vsub.f32 %v282, %v915
        %917 = vmatpush.msra.mxu0 %v916
        %v918 = vand.u32 %v280, 4294901760
        %v919 = vsub.f32 %v280, %v918
        %920 = vmatpush.msra.mxu0 %v919
        %v921 = vand.u32 %v278, 4294901760
        %v922 = vsub.f32 %v278, %v921
        %923 = vmatpush.msra.mxu0 %v922
        %v924 = vand.u32 %v276, 4294901760
        %v925 = vsub.f32 %v276, %v924
        %926 = vmatpush.msra.mxu0 %v925
        %v927 = vand.u32 %v307, 4294901760
        %v928 = vsub.f32 %v307, %v927
        %929 = vmatmul.f32.gmra.mxu0 %v928
        %v930 = vpop.f32.mrf.mxu0
        %v931 = vadd.f32 %v869, %v930
        %v932 = vand.u32 %v308, 4294901760
        %v933 = vsub.f32 %v308, %v932
        %934 = vmatmul.f32.gmra.mxu0 %v933
        %v935 = vpop.f32.mrf.mxu0
        %v936 = vadd.f32 %v873, %v935
        %v937 = vand.u32 %v309, 4294901760
        %v938 = vsub.f32 %v309, %v937
        %939 = vmatmul.f32.gmra.mxu0 %v938
        %v940 = vpop.f32.mrf.mxu0
        %v941 = vadd.f32 %v877, %v940
        %942 = vdwg.mxu0
        %v943 = vand.u32 %v306, 4294901760
        %944 = vmatpush.msra.mxu0 %v943
        %v945 = vand.u32 %v304, 4294901760
        %946 = vmatpush.msra.mxu0 %v945
        %v947 = vand.u32 %v302, 4294901760
        %948 = vmatpush.msra.mxu0 %v947
        %v949 = vand.u32 %v300, 4294901760
        %950 = vmatpush.msra.mxu0 %v949
        %v951 = vand.u32 %v298, 4294901760
        %952 = vmatpush.msra.mxu0 %v951
        %v953 = vand.u32 %v296, 4294901760
        %954 = vmatpush.msra.mxu0 %v953
        %v955 = vand.u32 %v294, 4294901760
        %956 = vmatpush.msra.mxu0 %v955
        %v957 = vand.u32 %v292, 4294901760
        %958 = vmatpush.msra.mxu0 %v957
        %v959 = vand.u32 %v290, 4294901760
        %960 = vmatpush.msra.mxu0 %v959
        %v961 = vand.u32 %v288, 4294901760
        %962 = vmatpush.msra.mxu0 %v961
        %v963 = vand.u32 %v286, 4294901760
        %964 = vmatpush.msra.mxu0 %v963
        %v965 = vand.u32 %v284, 4294901760
        %966 = vmatpush.msra.mxu0 %v965
        %v967 = vand.u32 %v282, 4294901760
        %968 = vmatpush.msra.mxu0 %v967
        %v969 = vand.u32 %v280, 4294901760
        %970 = vmatpush.msra.mxu0 %v969
        %v971 = vand.u32 %v278, 4294901760
        %972 = vmatpush.msra.mxu0 %v971
        %v973 = vand.u32 %v276, 4294901760
        %974 = vmatpush.msra.mxu0 %v973
        %v975 = vand.u32 %v307, 4294901760
        %v976 = vsub.f32 %v307, %v975
        %v977 = vand.u32 %v976, 4294901760
        %978 = vmatmul.f32.gmra.mxu0 %v977
        %v979 = vpop.f32.mrf.mxu0
        %v980 = vadd.f32 %v931, %v979
        %v981 = vand.u32 %v308, 4294901760
        %v982 = vsub.f32 %v308, %v981
        %v983 = vand.u32 %v982, 4294901760
        %984 = vmatmul.f32.gmra.mxu0 %v983
        %v985 = vpop.f32.mrf.mxu0
        %v986 = vadd.f32 %v936, %v985
        %v987 = vand.u32 %v309, 4294901760
        %v988 = vsub.f32 %v309, %v987
        %v989 = vand.u32 %v988, 4294901760
        %990 = vmatmul.f32.gmra.mxu0 %v989
        %v991 = vpop.f32.mrf.mxu0
        %v992 = vadd.f32 %v941, %v991
        %993 = vdwg.mxu0
        %v994 = vand.u32 %v306, 4294901760
        %v995 = vsub.f32 %v306, %v994
        %v996 = vand.u32 %v995, 4294901760
        %997 = vmatpush.msra.mxu0 %v996
        %v998 = vand.u32 %v304, 4294901760
        %v999 = vsub.f32 %v304, %v998
        %v1000 = vand.u32 %v999, 4294901760
        %1001 = vmatpush.msra.mxu0 %v1000
        %v1002 = vand.u32 %v302, 4294901760
        %v1003 = vsub.f32 %v302, %v1002
        %v1004 = vand.u32 %v1003, 4294901760
        %1005 = vmatpush.msra.mxu0 %v1004
        %v1006 = vand.u32 %v300, 4294901760
        %v1007 = vsub.f32 %v300, %v1006
        %v1008 = vand.u32 %v1007, 4294901760
        %1009 = vmatpush.msra.mxu0 %v1008
        %v1010 = vand.u32 %v298, 4294901760
        %v1011 = vsub.f32 %v298, %v1010
        %v1012 = vand.u32 %v1011, 4294901760
        %1013 = vmatpush.msra.mxu0 %v1012
        %v1014 = vand.u32 %v296, 4294901760
        %v1015 = vsub.f32 %v296, %v1014
        %v1016 = vand.u32 %v1015, 4294901760
        %1017 = vmatpush.msra.mxu0 %v1016
        %v1018 = vand.u32 %v294, 4294901760
        %v1019 = vsub.f32 %v294, %v1018
        %v1020 = vand.u32 %v1019, 4294901760
        %1021 = vmatpush.msra.mxu0 %v1020
        %v1022 = vand.u32 %v292, 4294901760
        %v1023 = vsub.f32 %v292, %v1022
        %v1024 = vand.u32 %v1023, 4294901760
        %1025 = vmatpush.msra.mxu0 %v1024
        %v1026 = vand.u32 %v290, 4294901760
        %v1027 = vsub.f32 %v290, %v1026
        %v1028 = vand.u32 %v1027, 4294901760
        %1029 = vmatpush.msra.mxu0 %v1028
        %v1030 = vand.u32 %v288, 4294901760
        %v1031 = vsub.f32 %v288, %v1030
        %v1032 = vand.u32 %v1031, 4294901760
        %1033 = vmatpush.msra.mxu0 %v1032
        %v1034 = vand.u32 %v286, 4294901760
        %v1035 = vsub.f32 %v286, %v1034
        %v1036 = vand.u32 %v1035, 4294901760
        %1037 = vmatpush.msra.mxu0 %v1036
        %v1038 = vand.u32 %v284, 4294901760
        %v1039 = vsub.f32 %v284, %v1038
        %v1040 = vand.u32 %v1039, 4294901760
        %1041 = vmatpush.msra.mxu0 %v1040
        %v1042 = vand.u32 %v282, 4294901760
        %v1043 = vsub.f32 %v282, %v1042
        %v1044 = vand.u32 %v1043, 4294901760
        %1045 = vmatpush.msra.mxu0 %v1044
        %v1046 = vand.u32 %v280, 4294901760
        %v1047 = vsub.f32 %v280, %v1046
        %v1048 = vand.u32 %v1047, 4294901760
        %1049 = vmatpush.msra.mxu0 %v1048
        %v1050 = vand.u32 %v278, 4294901760
        %v1051 = vsub.f32 %v278, %v1050
        %v1052 = vand.u32 %v1051, 4294901760
        %1053 = vmatpush.msra.mxu0 %v1052
        %v1054 = vand.u32 %v276, 4294901760
        %v1055 = vsub.f32 %v276, %v1054
        %v1056 = vand.u32 %v1055, 4294901760
        %1057 = vmatpush.msra.mxu0 %v1056
        %v1058 = vand.u32 %v307, 4294901760
        %1059 = vmatmul.f32.gmra.mxu0 %v1058
        %v1060 = vpop.f32.mrf.mxu0
        %v1061 = vadd.f32 %v980, %v1060
        %v1062 = vand.u32 %v308, 4294901760
        %1063 = vmatmul.f32.gmra.mxu0 %v1062
        %v1064 = vpop.f32.mrf.mxu0
        %v1065 = vadd.f32 %v986, %v1064
        %v1066 = vand.u32 %v309, 4294901760
        %1067 = vmatmul.f32.gmra.mxu0 %v1066
        %v1068 = vpop.f32.mrf.mxu0
        %v1069 = vadd.f32 %v992, %v1068
        %1070 = vdwg.mxu0
        %v1071 = vand.u32 %v306, 4294901760
        %1072 = vmatpush.msra.mxu0 %v1071
        %v1073 = vand.u32 %v304, 4294901760
        %1074 = vmatpush.msra.mxu0 %v1073
        %v1075 = vand.u32 %v302, 4294901760
        %1076 = vmatpush.msra.mxu0 %v1075
        %v1077 = vand.u32 %v300, 4294901760
        %1078 = vmatpush.msra.mxu0 %v1077
        %v1079 = vand.u32 %v298, 4294901760
        %1080 = vmatpush.msra.mxu0 %v1079
        %v1081 = vand.u32 %v296, 4294901760
        %1082 = vmatpush.msra.mxu0 %v1081
        %v1083 = vand.u32 %v294, 4294901760
        %1084 = vmatpush.msra.mxu0 %v1083
        %v1085 = vand.u32 %v292, 4294901760
        %1086 = vmatpush.msra.mxu0 %v1085
        %v1087 = vand.u32 %v290, 4294901760
        %1088 = vmatpush.msra.mxu0 %v1087
        %v1089 = vand.u32 %v288, 4294901760
        %1090 = vmatpush.msra.mxu0 %v1089
        %v1091 = vand.u32 %v286, 4294901760
        %1092 = vmatpush.msra.mxu0 %v1091
        %v1093 = vand.u32 %v284, 4294901760
        %1094 = vmatpush.msra.mxu0 %v1093
        %v1095 = vand.u32 %v282, 4294901760
        %1096 = vmatpush.msra.mxu0 %v1095
        %v1097 = vand.u32 %v280, 4294901760
        %1098 = vmatpush.msra.mxu0 %v1097
        %v1099 = vand.u32 %v278, 4294901760
        %1100 = vmatpush.msra.mxu0 %v1099
        %v1101 = vand.u32 %v276, 4294901760
        %1102 = vmatpush.msra.mxu0 %v1101
        %v1103 = vand.u32 %v307, 4294901760
        %1104 = vmatmul.f32.gmra.mxu0 %v1103
        %v1105 = vpop.f32.mrf.mxu0
        %v1106 = vadd.f32 %v1061, %v1105
        %v1107 = vand.u32 %v308, 4294901760
        %1108 = vmatmul.f32.gmra.mxu0 %v1107
        %v1109 = vpop.f32.mrf.mxu0
        %v1110 = vadd.f32 %v1065, %v1109
        %v1111 = vand.u32 %v309, 4294901760
        %1112 = vmatmul.f32.gmra.mxu0 %v1111
        %v1113 = vpop.f32.mrf.mxu0
        %v1114 = vadd.f32 %v1069, %v1113
        %1115 = vdwg.mxu0
        %v1116 = vld [vmem:[%s237] sm:$0xff]
        %v1117 = vld [vmem:[%s237 + $0x8] sm:$0xff]
        %v1118 = vld [vmem:[%s237 + $0x10] sm:$0xff]
        %v1119 = vand.u32 %v305, 4294901760
        %1120 = vmatpush.msra.mxu0 %v1119
        %v1121 = vand.u32 %v303, 4294901760
        %1122 = vmatpush.msra.mxu0 %v1121
        %v1123 = vand.u32 %v301, 4294901760
        %1124 = vmatpush.msra.mxu0 %v1123
        %v1125 = vand.u32 %v299, 4294901760
        %1126 = vmatpush.msra.mxu0 %v1125
        %v1127 = vand.u32 %v297, 4294901760
        %1128 = vmatpush.msra.mxu0 %v1127
        %v1129 = vand.u32 %v295, 4294901760
        %1130 = vmatpush.msra.mxu0 %v1129
        %v1131 = vand.u32 %v293, 4294901760
        %1132 = vmatpush.msra.mxu0 %v1131
        %v1133 = vand.u32 %v291, 4294901760
        %1134 = vmatpush.msra.mxu0 %v1133
        %v1135 = vand.u32 %v289, 4294901760
        %1136 = vmatpush.msra.mxu0 %v1135
        %v1137 = vand.u32 %v287, 4294901760
        %1138 = vmatpush.msra.mxu0 %v1137
        %v1139 = vand.u32 %v285, 4294901760
        %1140 = vmatpush.msra.mxu0 %v1139
        %v1141 = vand.u32 %v283, 4294901760
        %1142 = vmatpush.msra.mxu0 %v1141
        %v1143 = vand.u32 %v281, 4294901760
        %1144 = vmatpush.msra.mxu0 %v1143
        %v1145 = vand.u32 %v279, 4294901760
        %1146 = vmatpush.msra.mxu0 %v1145
        %v1147 = vand.u32 %v277, 4294901760
        %1148 = vmatpush.msra.mxu0 %v1147
        %v1149 = vand.u32 %v275, 4294901760
        %1150 = vmatpush.msra.mxu0 %v1149
        %v1151 = vand.u32 %v1116, 4294901760
        %v1152 = vsub.f32 %v1116, %v1151
        %v1153 = vand.u32 %v1152, 4294901760
        %v1154 = vsub.f32 %v1152, %v1153
        %v1155 = vand.u32 %v1154, 4294901760
        %1156 = vmatmul.f32.gmra.mxu0 %v1155
        %v1157 = vpop.f32.mrf.mxu0
        %v1158 = vadd.f32 0.0, %v1157
        %v1159 = vand.u32 %v1117, 4294901760
        %v1160 = vsub.f32 %v1117, %v1159
        %v1161 = vand.u32 %v1160, 4294901760
        %v1162 = vsub.f32 %v1160, %v1161
        %v1163 = vand.u32 %v1162, 4294901760
        %1164 = vmatmul.f32.gmra.mxu0 %v1163
        %v1165 = vpop.f32.mrf.mxu0
        %v1166 = vadd.f32 0.0, %v1165
        %v1167 = vand.u32 %v1118, 4294901760
        %v1168 = vsub.f32 %v1118, %v1167
        %v1169 = vand.u32 %v1168, 4294901760
        %v1170 = vsub.f32 %v1168, %v1169
        %v1171 = vand.u32 %v1170, 4294901760
        %1172 = vmatmul.f32.gmra.mxu0 %v1171
        %v1173 = vpop.f32.mrf.mxu0
        %v1174 = vadd.f32 0.0, %v1173
        %1175 = vdwg.mxu0
        %v1176 = vand.u32 %v305, 4294901760
        %v1177 = vsub.f32 %v305, %v1176
        %v1178 = vand.u32 %v1177, 4294901760
        %v1179 = vsub.f32 %v1177, %v1178
        %v1180 = vand.u32 %v1179, 4294901760
        %1181 = vmatpush.msra.mxu0 %v1180
        %v1182 = vand.u32 %v303, 4294901760
        %v1183 = vsub.f32 %v303, %v1182
        %v1184 = vand.u32 %v1183, 4294901760
        %v1185 = vsub.f32 %v1183, %v1184
        %v1186 = vand.u32 %v1185, 4294901760
        %1187 = vmatpush.msra.mxu0 %v1186
        %v1188 = vand.u32 %v301, 4294901760
        %v1189 = vsub.f32 %v301, %v1188
        %v1190 = vand.u32 %v1189, 4294901760
        %v1191 = vsub.f32 %v1189, %v1190
        %v1192 = vand.u32 %v1191, 4294901760
        %1193 = vmatpush.msra.mxu0 %v1192
        %v1194 = vand.u32 %v299, 4294901760
        %v1195 = vsub.f32 %v299, %v1194
        %v1196 = vand.u32 %v1195, 4294901760
        %v1197 = vsub.f32 %v1195, %v1196
        %v1198 = vand.u32 %v1197, 4294901760
        %1199 = vmatpush.msra.mxu0 %v1198
        %v1200 = vand.u32 %v297, 4294901760
        %v1201 = vsub.f32 %v297, %v1200
        %v1202 = vand.u32 %v1201, 4294901760
        %v1203 = vsub.f32 %v1201, %v1202
        %v1204 = vand.u32 %v1203, 4294901760
        %1205 = vmatpush.msra.mxu0 %v1204
        %v1206 = vand.u32 %v295, 4294901760
        %v1207 = vsub.f32 %v295, %v1206
        %v1208 = vand.u32 %v1207, 4294901760
        %v1209 = vsub.f32 %v1207, %v1208
        %v1210 = vand.u32 %v1209, 4294901760
        %1211 = vmatpush.msra.mxu0 %v1210
        %v1212 = vand.u32 %v293, 4294901760
        %v1213 = vsub.f32 %v293, %v1212
        %v1214 = vand.u32 %v1213, 4294901760
        %v1215 = vsub.f32 %v1213, %v1214
        %v1216 = vand.u32 %v1215, 4294901760
        %1217 = vmatpush.msra.mxu0 %v1216
        %v1218 = vand.u32 %v291, 4294901760
        %v1219 = vsub.f32 %v291, %v1218
        %v1220 = vand.u32 %v1219, 4294901760
        %v1221 = vsub.f32 %v1219, %v1220
        %v1222 = vand.u32 %v1221, 4294901760
        %1223 = vmatpush.msra.mxu0 %v1222
        %v1224 = vand.u32 %v289, 4294901760
        %v1225 = vsub.f32 %v289, %v1224
        %v1226 = vand.u32 %v1225, 4294901760
        %v1227 = vsub.f32 %v1225, %v1226
        %v1228 = vand.u32 %v1227, 4294901760
        %1229 = vmatpush.msra.mxu0 %v1228
        %v1230 = vand.u32 %v287, 4294901760
        %v1231 = vsub.f32 %v287, %v1230
        %v1232 = vand.u32 %v1231, 4294901760
        %v1233 = vsub.f32 %v1231, %v1232
        %v1234 = vand.u32 %v1233, 4294901760
        %1235 = vmatpush.msra.mxu0 %v1234
        %v1236 = vand.u32 %v285, 4294901760
        %v1237 = vsub.f32 %v285, %v1236
        %v1238 = vand.u32 %v1237, 4294901760
        %v1239 = vsub.f32 %v1237, %v1238
        %v1240 = vand.u32 %v1239, 4294901760
        %1241 = vmatpush.msra.mxu0 %v1240
        %v1242 = vand.u32 %v283, 4294901760
        %v1243 = vsub.f32 %v283, %v1242
        %v1244 = vand.u32 %v1243, 4294901760
        %v1245 = vsub.f32 %v1243, %v1244
        %v1246 = vand.u32 %v1245, 4294901760
        %1247 = vmatpush.msra.mxu0 %v1246
        %v1248 = vand.u32 %v281, 4294901760
        %v1249 = vsub.f32 %v281, %v1248
        %v1250 = vand.u32 %v1249, 4294901760
        %v1251 = vsub.f32 %v1249, %v1250
        %v1252 = vand.u32 %v1251, 4294901760
        %1253 = vmatpush.msra.mxu0 %v1252
        %v1254 = vand.u32 %v279, 4294901760
        %v1255 = vsub.f32 %v279, %v1254
        %v1256 = vand.u32 %v1255, 4294901760
        %v1257 = vsub.f32 %v1255, %v1256
        %v1258 = vand.u32 %v1257, 4294901760
        %1259 = vmatpush.msra.mxu0 %v1258
        %v1260 = vand.u32 %v277, 4294901760
        %v1261 = vsub.f32 %v277, %v1260
        %v1262 = vand.u32 %v1261, 4294901760
        %v1263 = vsub.f32 %v1261, %v1262
        %v1264 = vand.u32 %v1263, 4294901760
        %1265 = vmatpush.msra.mxu0 %v1264
        %v1266 = vand.u32 %v275, 4294901760
        %v1267 = vsub.f32 %v275, %v1266
        %v1268 = vand.u32 %v1267, 4294901760
        %v1269 = vsub.f32 %v1267, %v1268
        %v1270 = vand.u32 %v1269, 4294901760
        %1271 = vmatpush.msra.mxu0 %v1270
        %v1272 = vand.u32 %v1116, 4294901760
        %1273 = vmatmul.f32.gmra.mxu0 %v1272
        %v1274 = vpop.f32.mrf.mxu0
        %v1275 = vadd.f32 %v1158, %v1274
        %v1276 = vand.u32 %v1117, 4294901760
        %1277 = vmatmul.f32.gmra.mxu0 %v1276
        %v1278 = vpop.f32.mrf.mxu0
        %v1279 = vadd.f32 %v1166, %v1278
        %v1280 = vand.u32 %v1118, 4294901760
        %1281 = vmatmul.f32.gmra.mxu0 %v1280
        %v1282 = vpop.f32.mrf.mxu0
        %v1283 = vadd.f32 %v1174, %v1282
        %1284 = vdwg.mxu0
        %v1285 = vand.u32 %v305, 4294901760
        %v1286 = vsub.f32 %v305, %v1285
        %1287 = vmatpush.msra.mxu0 %v1286
        %v1288 = vand.u32 %v303, 4294901760
        %v1289 = vsub.f32 %v303, %v1288
        %1290 = vmatpush.msra.mxu0 %v1289
        %v1291 = vand.u32 %v301, 4294901760
        %v1292 = vsub.f32 %v301, %v1291
        %1293 = vmatpush.msra.mxu0 %v1292
        %v1294 = vand.u32 %v299, 4294901760
        %v1295 = vsub.f32 %v299, %v1294
        %1296 = vmatpush.msra.mxu0 %v1295
        %v1297 = vand.u32 %v297, 4294901760
        %v1298 = vsub.f32 %v297, %v1297
        %1299 = vmatpush.msra.mxu0 %v1298
        %v1300 = vand.u32 %v295, 4294901760
        %v1301 = vsub.f32 %v295, %v1300
        %1302 = vmatpush.msra.mxu0 %v1301
        %v1303 = vand.u32 %v293, 4294901760
        %v1304 = vsub.f32 %v293, %v1303
        %1305 = vmatpush.msra.mxu0 %v1304
        %v1306 = vand.u32 %v291, 4294901760
        %v1307 = vsub.f32 %v291, %v1306
        %1308 = vmatpush.msra.mxu0 %v1307
        %v1309 = vand.u32 %v289, 4294901760
        %v1310 = vsub.f32 %v289, %v1309
        %1311 = vmatpush.msra.mxu0 %v1310
        %v1312 = vand.u32 %v287, 4294901760
        %v1313 = vsub.f32 %v287, %v1312
        %1314 = vmatpush.msra.mxu0 %v1313
        %v1315 = vand.u32 %v285, 4294901760
        %v1316 = vsub.f32 %v285, %v1315
        %1317 = vmatpush.msra.mxu0 %v1316
        %v1318 = vand.u32 %v283, 4294901760
        %v1319 = vsub.f32 %v283, %v1318
        %1320 = vmatpush.msra.mxu0 %v1319
        %v1321 = vand.u32 %v281, 4294901760
        %v1322 = vsub.f32 %v281, %v1321
        %1323 = vmatpush.msra.mxu0 %v1322
        %v1324 = vand.u32 %v279, 4294901760
        %v1325 = vsub.f32 %v279, %v1324
        %1326 = vmatpush.msra.mxu0 %v1325
        %v1327 = vand.u32 %v277, 4294901760
        %v1328 = vsub.f32 %v277, %v1327
        %1329 = vmatpush.msra.mxu0 %v1328
        %v1330 = vand.u32 %v275, 4294901760
        %v1331 = vsub.f32 %v275, %v1330
        %1332 = vmatpush.msra.mxu0 %v1331
        %v1333 = vand.u32 %v1116, 4294901760
        %v1334 = vsub.f32 %v1116, %v1333
        %1335 = vmatmul.f32.gmra.mxu0 %v1334
        %v1336 = vpop.f32.mrf.mxu0
        %v1337 = vadd.f32 %v1275, %v1336
        %v1338 = vand.u32 %v1117, 4294901760
        %v1339 = vsub.f32 %v1117, %v1338
        %1340 = vmatmul.f32.gmra.mxu0 %v1339
        %v1341 = vpop.f32.mrf.mxu0
        %v1342 = vadd.f32 %v1279, %v1341
        %v1343 = vand.u32 %v1118, 4294901760
        %v1344 = vsub.f32 %v1118, %v1343
        %1345 = vmatmul.f32.gmra.mxu0 %v1344
        %v1346 = vpop.f32.mrf.mxu0
        %v1347 = vadd.f32 %v1283, %v1346
        %1348 = vdwg.mxu0
        %v1349 = vand.u32 %v305, 4294901760
        %1350 = vmatpush.msra.mxu0 %v1349
        %v1351 = vand.u32 %v303, 4294901760
        %1352 = vmatpush.msra.mxu0 %v1351
        %v1353 = vand.u32 %v301, 4294901760
        %1354 = vmatpush.msra.mxu0 %v1353
        %v1355 = vand.u32 %v299, 4294901760
        %1356 = vmatpush.msra.mxu0 %v1355
        %v1357 = vand.u32 %v297, 4294901760
        %1358 = vmatpush.msra.mxu0 %v1357
        %v1359 = vand.u32 %v295, 4294901760
        %1360 = vmatpush.msra.mxu0 %v1359
        %v1361 = vand.u32 %v293, 4294901760
        %1362 = vmatpush.msra.mxu0 %v1361
        %v1363 = vand.u32 %v291, 4294901760
        %1364 = vmatpush.msra.mxu0 %v1363
        %v1365 = vand.u32 %v289, 4294901760
        %1366 = vmatpush.msra.mxu0 %v1365
        %v1367 = vand.u32 %v287, 4294901760
        %1368 = vmatpush.msra.mxu0 %v1367
        %v1369 = vand.u32 %v285, 4294901760
        %1370 = vmatpush.msra.mxu0 %v1369
        %v1371 = vand.u32 %v283, 4294901760
        %1372 = vmatpush.msra.mxu0 %v1371
        %v1373 = vand.u32 %v281, 4294901760
        %1374 = vmatpush.msra.mxu0 %v1373
        %v1375 = vand.u32 %v279, 4294901760
        %1376 = vmatpush.msra.mxu0 %v1375
        %v1377 = vand.u32 %v277, 4294901760
        %1378 = vmatpush.msra.mxu0 %v1377
        %v1379 = vand.u32 %v275, 4294901760
        %1380 = vmatpush.msra.mxu0 %v1379
        %v1381 = vand.u32 %v1116, 4294901760
        %v1382 = vsub.f32 %v1116, %v1381
        %v1383 = vand.u32 %v1382, 4294901760
        %1384 = vmatmul.f32.gmra.mxu0 %v1383
        %v1385 = vpop.f32.mrf.mxu0
        %v1386 = vadd.f32 %v1337, %v1385
        %v1387 = vand.u32 %v1117, 4294901760
        %v1388 = vsub.f32 %v1117, %v1387
        %v1389 = vand.u32 %v1388, 4294901760
        %1390 = vmatmul.f32.gmra.mxu0 %v1389
        %v1391 = vpop.f32.mrf.mxu0
        %v1392 = vadd.f32 %v1342, %v1391
        %v1393 = vand.u32 %v1118, 4294901760
        %v1394 = vsub.f32 %v1118, %v1393
        %v1395 = vand.u32 %v1394, 4294901760
        %1396 = vmatmul.f32.gmra.mxu0 %v1395
        %v1397 = vpop.f32.mrf.mxu0
        %v1398 = vadd.f32 %v1347, %v1397
        %1399 = vdwg.mxu0
        %v1400 = vand.u32 %v305, 4294901760
        %v1401 = vsub.f32 %v305, %v1400
        %v1402 = vand.u32 %v1401, 4294901760
        %1403 = vmatpush.msra.mxu0 %v1402
        %v1404 = vand.u32 %v303, 4294901760
        %v1405 = vsub.f32 %v303, %v1404
        %v1406 = vand.u32 %v1405, 4294901760
        %1407 = vmatpush.msra.mxu0 %v1406
        %v1408 = vand.u32 %v301, 4294901760
        %v1409 = vsub.f32 %v301, %v1408
        %v1410 = vand.u32 %v1409, 4294901760
        %1411 = vmatpush.msra.mxu0 %v1410
        %v1412 = vand.u32 %v299, 4294901760
        %v1413 = vsub.f32 %v299, %v1412
        %v1414 = vand.u32 %v1413, 4294901760
        %1415 = vmatpush.msra.mxu0 %v1414
        %v1416 = vand.u32 %v297, 4294901760
        %v1417 = vsub.f32 %v297, %v1416
        %v1418 = vand.u32 %v1417, 4294901760
        %1419 = vmatpush.msra.mxu0 %v1418
        %v1420 = vand.u32 %v295, 4294901760
        %v1421 = vsub.f32 %v295, %v1420
        %v1422 = vand.u32 %v1421, 4294901760
        %1423 = vmatpush.msra.mxu0 %v1422
        %v1424 = vand.u32 %v293, 4294901760
        %v1425 = vsub.f32 %v293, %v1424
        %v1426 = vand.u32 %v1425, 4294901760
        %1427 = vmatpush.msra.mxu0 %v1426
        %v1428 = vand.u32 %v291, 4294901760
        %v1429 = vsub.f32 %v291, %v1428
        %v1430 = vand.u32 %v1429, 4294901760
        %1431 = vmatpush.msra.mxu0 %v1430
        %v1432 = vand.u32 %v289, 4294901760
        %v1433 = vsub.f32 %v289, %v1432
        %v1434 = vand.u32 %v1433, 4294901760
        %1435 = vmatpush.msra.mxu0 %v1434
        %v1436 = vand.u32 %v287, 4294901760
        %v1437 = vsub.f32 %v287, %v1436
        %v1438 = vand.u32 %v1437, 4294901760
        %1439 = vmatpush.msra.mxu0 %v1438
        %v1440 = vand.u32 %v285, 4294901760
        %v1441 = vsub.f32 %v285, %v1440
        %v1442 = vand.u32 %v1441, 4294901760
        %1443 = vmatpush.msra.mxu0 %v1442
        %v1444 = vand.u32 %v283, 4294901760
        %v1445 = vsub.f32 %v283, %v1444
        %v1446 = vand.u32 %v1445, 4294901760
        %1447 = vmatpush.msra.mxu0 %v1446
        %v1448 = vand.u32 %v281, 4294901760
        %v1449 = vsub.f32 %v281, %v1448
        %v1450 = vand.u32 %v1449, 4294901760
        %1451 = vmatpush.msra.mxu0 %v1450
        %v1452 = vand.u32 %v279, 4294901760
        %v1453 = vsub.f32 %v279, %v1452
        %v1454 = vand.u32 %v1453, 4294901760
        %1455 = vmatpush.msra.mxu0 %v1454
        %v1456 = vand.u32 %v277, 4294901760
        %v1457 = vsub.f32 %v277, %v1456
        %v1458 = vand.u32 %v1457, 4294901760
        %1459 = vmatpush.msra.mxu0 %v1458
        %v1460 = vand.u32 %v275, 4294901760
        %v1461 = vsub.f32 %v275, %v1460
        %v1462 = vand.u32 %v1461, 4294901760
        %1463 = vmatpush.msra.mxu0 %v1462
        %v1464 = vand.u32 %v1116, 4294901760
        %1465 = vmatmul.f32.gmra.mxu0 %v1464
        %v1466 = vpop.f32.mrf.mxu0
        %v1467 = vadd.f32 %v1386, %v1466
        %v1468 = vand.u32 %v1117, 4294901760
        %1469 = vmatmul.f32.gmra.mxu0 %v1468
        %v1470 = vpop.f32.mrf.mxu0
        %v1471 = vadd.f32 %v1392, %v1470
        %v1472 = vand.u32 %v1118, 4294901760
        %1473 = vmatmul.f32.gmra.mxu0 %v1472
        %v1474 = vpop.f32.mrf.mxu0
        %v1475 = vadd.f32 %v1398, %v1474
        %1476 = vdwg.mxu0
        %v1477 = vand.u32 %v305, 4294901760
        %1478 = vmatpush.msra.mxu0 %v1477
        %v1479 = vand.u32 %v303, 4294901760
        %1480 = vmatpush.msra.mxu0 %v1479
        %v1481 = vand.u32 %v301, 4294901760
        %1482 = vmatpush.msra.mxu0 %v1481
        %v1483 = vand.u32 %v299, 4294901760
        %1484 = vmatpush.msra.mxu0 %v1483
        %v1485 = vand.u32 %v297, 4294901760
        %1486 = vmatpush.msra.mxu0 %v1485
        %v1487 = vand.u32 %v295, 4294901760
        %1488 = vmatpush.msra.mxu0 %v1487
        %v1489 = vand.u32 %v293, 4294901760
        %1490 = vmatpush.msra.mxu0 %v1489
        %v1491 = vand.u32 %v291, 4294901760
        %1492 = vmatpush.msra.mxu0 %v1491
        %v1493 = vand.u32 %v289, 4294901760
        %1494 = vmatpush.msra.mxu0 %v1493
        %v1495 = vand.u32 %v287, 4294901760
        %1496 = vmatpush.msra.mxu0 %v1495
        %v1497 = vand.u32 %v285, 4294901760
        %1498 = vmatpush.msra.mxu0 %v1497
        %v1499 = vand.u32 %v283, 4294901760
        %1500 = vmatpush.msra.mxu0 %v1499
        %v1501 = vand.u32 %v281, 4294901760
        %1502 = vmatpush.msra.mxu0 %v1501
        %v1503 = vand.u32 %v279, 4294901760
        %1504 = vmatpush.msra.mxu0 %v1503
        %v1505 = vand.u32 %v277, 4294901760
        %1506 = vmatpush.msra.mxu0 %v1505
        %v1507 = vand.u32 %v275, 4294901760
        %1508 = vmatpush.msra.mxu0 %v1507
        %v1509 = vand.u32 %v1116, 4294901760
        %1510 = vmatmul.f32.gmra.mxu0 %v1509
        %v1511 = vpop.f32.mrf.mxu0
        %v1512 = vadd.f32 %v1467, %v1511
        %v1513 = vand.u32 %v1117, 4294901760
        %1514 = vmatmul.f32.gmra.mxu0 %v1513
        %v1515 = vpop.f32.mrf.mxu0
        %v1516 = vadd.f32 %v1471, %v1515
        %v1517 = vand.u32 %v1118, 4294901760
        %1518 = vmatmul.f32.gmra.mxu0 %v1517
        %v1519 = vpop.f32.mrf.mxu0
        %v1520 = vadd.f32 %v1475, %v1519
        %1521 = vdwg.mxu0
        %v1522 = vand.u32 %v306, 4294901760
        %1523 = vmatpush.msra.mxu0 %v1522
        %v1524 = vand.u32 %v304, 4294901760
        %1525 = vmatpush.msra.mxu0 %v1524
        %v1526 = vand.u32 %v302, 4294901760
        %1527 = vmatpush.msra.mxu0 %v1526
        %v1528 = vand.u32 %v300, 4294901760
        %1529 = vmatpush.msra.mxu0 %v1528
        %v1530 = vand.u32 %v298, 4294901760
        %1531 = vmatpush.msra.mxu0 %v1530
        %v1532 = vand.u32 %v296, 4294901760
        %1533 = vmatpush.msra.mxu0 %v1532
        %v1534 = vand.u32 %v294, 4294901760
        %1535 = vmatpush.msra.mxu0 %v1534
        %v1536 = vand.u32 %v292, 4294901760
        %1537 = vmatpush.msra.mxu0 %v1536
        %v1538 = vand.u32 %v290, 4294901760
        %1539 = vmatpush.msra.mxu0 %v1538
        %v1540 = vand.u32 %v288, 4294901760
        %1541 = vmatpush.msra.mxu0 %v1540
        %v1542 = vand.u32 %v286, 4294901760
        %1543 = vmatpush.msra.mxu0 %v1542
        %v1544 = vand.u32 %v284, 4294901760
        %1545 = vmatpush.msra.mxu0 %v1544
        %v1546 = vand.u32 %v282, 4294901760
        %1547 = vmatpush.msra.mxu0 %v1546
        %v1548 = vand.u32 %v280, 4294901760
        %1549 = vmatpush.msra.mxu0 %v1548
        %v1550 = vand.u32 %v278, 4294901760
        %1551 = vmatpush.msra.mxu0 %v1550
        %v1552 = vand.u32 %v276, 4294901760
        %1553 = vmatpush.msra.mxu0 %v1552
        %v1554 = vand.u32 %v1116, 4294901760
        %v1555 = vsub.f32 %v1116, %v1554
        %v1556 = vand.u32 %v1555, 4294901760
        %v1557 = vsub.f32 %v1555, %v1556
        %v1558 = vand.u32 %v1557, 4294901760
        %1559 = vmatmul.f32.gmra.mxu0 %v1558
        %v1560 = vpop.f32.mrf.mxu0
        %v1561 = vadd.f32 0.0, %v1560
        %v1562 = vand.u32 %v1117, 4294901760
        %v1563 = vsub.f32 %v1117, %v1562
        %v1564 = vand.u32 %v1563, 4294901760
        %v1565 = vsub.f32 %v1563, %v1564
        %v1566 = vand.u32 %v1565, 4294901760
        %1567 = vmatmul.f32.gmra.mxu0 %v1566
        %v1568 = vpop.f32.mrf.mxu0
        %v1569 = vadd.f32 0.0, %v1568
        %v1570 = vand.u32 %v1118, 4294901760
        %v1571 = vsub.f32 %v1118, %v1570
        %v1572 = vand.u32 %v1571, 4294901760
        %v1573 = vsub.f32 %v1571, %v1572
        %v1574 = vand.u32 %v1573, 4294901760
        %1575 = vmatmul.f32.gmra.mxu0 %v1574
        %v1576 = vpop.f32.mrf.mxu0
        %v1577 = vadd.f32 0.0, %v1576
        %1578 = vdwg.mxu0
        %v1579 = vand.u32 %v306, 4294901760
        %v1580 = vsub.f32 %v306, %v1579
        %v1581 = vand.u32 %v1580, 4294901760
        %v1582 = vsub.f32 %v1580, %v1581
        %v1583 = vand.u32 %v1582, 4294901760
        %1584 = vmatpush.msra.mxu0 %v1583
        %v1585 = vand.u32 %v304, 4294901760
        %v1586 = vsub.f32 %v304, %v1585
        %v1587 = vand.u32 %v1586, 4294901760
        %v1588 = vsub.f32 %v1586, %v1587
        %v1589 = vand.u32 %v1588, 4294901760
        %1590 = vmatpush.msra.mxu0 %v1589
        %v1591 = vand.u32 %v302, 4294901760
        %v1592 = vsub.f32 %v302, %v1591
        %v1593 = vand.u32 %v1592, 4294901760
        %v1594 = vsub.f32 %v1592, %v1593
        %v1595 = vand.u32 %v1594, 4294901760
        %1596 = vmatpush.msra.mxu0 %v1595
        %v1597 = vand.u32 %v300, 4294901760
        %v1598 = vsub.f32 %v300, %v1597
        %v1599 = vand.u32 %v1598, 4294901760
        %v1600 = vsub.f32 %v1598, %v1599
        %v1601 = vand.u32 %v1600, 4294901760
        %1602 = vmatpush.msra.mxu0 %v1601
        %v1603 = vand.u32 %v298, 4294901760
        %v1604 = vsub.f32 %v298, %v1603
        %v1605 = vand.u32 %v1604, 4294901760
        %v1606 = vsub.f32 %v1604, %v1605
        %v1607 = vand.u32 %v1606, 4294901760
        %1608 = vmatpush.msra.mxu0 %v1607
        %v1609 = vand.u32 %v296, 4294901760
        %v1610 = vsub.f32 %v296, %v1609
        %v1611 = vand.u32 %v1610, 4294901760
        %v1612 = vsub.f32 %v1610, %v1611
        %v1613 = vand.u32 %v1612, 4294901760
        %1614 = vmatpush.msra.mxu0 %v1613
        %v1615 = vand.u32 %v294, 4294901760
        %v1616 = vsub.f32 %v294, %v1615
        %v1617 = vand.u32 %v1616, 4294901760
        %v1618 = vsub.f32 %v1616, %v1617
        %v1619 = vand.u32 %v1618, 4294901760
        %1620 = vmatpush.msra.mxu0 %v1619
        %v1621 = vand.u32 %v292, 4294901760
        %v1622 = vsub.f32 %v292, %v1621
        %v1623 = vand.u32 %v1622, 4294901760
        %v1624 = vsub.f32 %v1622, %v1623
        %v1625 = vand.u32 %v1624, 4294901760
        %1626 = vmatpush.msra.mxu0 %v1625
        %v1627 = vand.u32 %v290, 4294901760
        %v1628 = vsub.f32 %v290, %v1627
        %v1629 = vand.u32 %v1628, 4294901760
        %v1630 = vsub.f32 %v1628, %v1629
        %v1631 = vand.u32 %v1630, 4294901760
        %1632 = vmatpush.msra.mxu0 %v1631
        %v1633 = vand.u32 %v288, 4294901760
        %v1634 = vsub.f32 %v288, %v1633
        %v1635 = vand.u32 %v1634, 4294901760
        %v1636 = vsub.f32 %v1634, %v1635
        %v1637 = vand.u32 %v1636, 4294901760
        %1638 = vmatpush.msra.mxu0 %v1637
        %v1639 = vand.u32 %v286, 4294901760
        %v1640 = vsub.f32 %v286, %v1639
        %v1641 = vand.u32 %v1640, 4294901760
        %v1642 = vsub.f32 %v1640, %v1641
        %v1643 = vand.u32 %v1642, 4294901760
        %1644 = vmatpush.msra.mxu0 %v1643
        %v1645 = vand.u32 %v284, 4294901760
        %v1646 = vsub.f32 %v284, %v1645
        %v1647 = vand.u32 %v1646, 4294901760
        %v1648 = vsub.f32 %v1646, %v1647
        %v1649 = vand.u32 %v1648, 4294901760
        %1650 = vmatpush.msra.mxu0 %v1649
        %v1651 = vand.u32 %v282, 4294901760
        %v1652 = vsub.f32 %v282, %v1651
        %v1653 = vand.u32 %v1652, 4294901760
        %v1654 = vsub.f32 %v1652, %v1653
        %v1655 = vand.u32 %v1654, 4294901760
        %1656 = vmatpush.msra.mxu0 %v1655
        %v1657 = vand.u32 %v280, 4294901760
        %v1658 = vsub.f32 %v280, %v1657
        %v1659 = vand.u32 %v1658, 4294901760
        %v1660 = vsub.f32 %v1658, %v1659
        %v1661 = vand.u32 %v1660, 4294901760
        %1662 = vmatpush.msra.mxu0 %v1661
        %v1663 = vand.u32 %v278, 4294901760
        %v1664 = vsub.f32 %v278, %v1663
        %v1665 = vand.u32 %v1664, 4294901760
        %v1666 = vsub.f32 %v1664, %v1665
        %v1667 = vand.u32 %v1666, 4294901760
        %1668 = vmatpush.msra.mxu0 %v1667
        %v1669 = vand.u32 %v276, 4294901760
        %v1670 = vsub.f32 %v276, %v1669
        %v1671 = vand.u32 %v1670, 4294901760
        %v1672 = vsub.f32 %v1670, %v1671
        %v1673 = vand.u32 %v1672, 4294901760
        %1674 = vmatpush.msra.mxu0 %v1673
        %v1675 = vand.u32 %v1116, 4294901760
        %1676 = vmatmul.f32.gmra.mxu0 %v1675
        %v1677 = vpop.f32.mrf.mxu0
        %v1678 = vadd.f32 %v1561, %v1677
        %v1679 = vand.u32 %v1117, 4294901760
        %1680 = vmatmul.f32.gmra.mxu0 %v1679
        %v1681 = vpop.f32.mrf.mxu0
        %v1682 = vadd.f32 %v1569, %v1681
        %v1683 = vand.u32 %v1118, 4294901760
        %1684 = vmatmul.f32.gmra.mxu0 %v1683
        %v1685 = vpop.f32.mrf.mxu0
        %v1686 = vadd.f32 %v1577, %v1685
        %1687 = vdwg.mxu0
        %v1688 = vand.u32 %v306, 4294901760
        %v1689 = vsub.f32 %v306, %v1688
        %1690 = vmatpush.msra.mxu0 %v1689
        %v1691 = vand.u32 %v304, 4294901760
        %v1692 = vsub.f32 %v304, %v1691
        %1693 = vmatpush.msra.mxu0 %v1692
        %v1694 = vand.u32 %v302, 4294901760
        %v1695 = vsub.f32 %v302, %v1694
        %1696 = vmatpush.msra.mxu0 %v1695
        %v1697 = vand.u32 %v300, 4294901760
        %v1698 = vsub.f32 %v300, %v1697
        %1699 = vmatpush.msra.mxu0 %v1698
        %v1700 = vand.u32 %v298, 4294901760
        %v1701 = vsub.f32 %v298, %v1700
        %1702 = vmatpush.msra.mxu0 %v1701
        %v1703 = vand.u32 %v296, 4294901760
        %v1704 = vsub.f32 %v296, %v1703
        %1705 = vmatpush.msra.mxu0 %v1704
        %v1706 = vand.u32 %v294, 4294901760
        %v1707 = vsub.f32 %v294, %v1706
        %1708 = vmatpush.msra.mxu0 %v1707
        %v1709 = vand.u32 %v292, 4294901760
        %v1710 = vsub.f32 %v292, %v1709
        %1711 = vmatpush.msra.mxu0 %v1710
        %v1712 = vand.u32 %v290, 4294901760
        %v1713 = vsub.f32 %v290, %v1712
        %1714 = vmatpush.msra.mxu0 %v1713
        %v1715 = vand.u32 %v288, 4294901760
        %v1716 = vsub.f32 %v288, %v1715
        %1717 = vmatpush.msra.mxu0 %v1716
        %v1718 = vand.u32 %v286, 4294901760
        %v1719 = vsub.f32 %v286, %v1718
        %1720 = vmatpush.msra.mxu0 %v1719
        %v1721 = vand.u32 %v284, 4294901760
        %v1722 = vsub.f32 %v284, %v1721
        %1723 = vmatpush.msra.mxu0 %v1722
        %v1724 = vand.u32 %v282, 4294901760
        %v1725 = vsub.f32 %v282, %v1724
        %1726 = vmatpush.msra.mxu0 %v1725
        %v1727 = vand.u32 %v280, 4294901760
        %v1728 = vsub.f32 %v280, %v1727
        %1729 = vmatpush.msra.mxu0 %v1728
        %v1730 = vand.u32 %v278, 4294901760
        %v1731 = vsub.f32 %v278, %v1730
        %1732 = vmatpush.msra.mxu0 %v1731
        %v1733 = vand.u32 %v276, 4294901760
        %v1734 = vsub.f32 %v276, %v1733
        %1735 = vmatpush.msra.mxu0 %v1734
        %v1736 = vand.u32 %v1116, 4294901760
        %v1737 = vsub.f32 %v1116, %v1736
        %1738 = vmatmul.f32.gmra.mxu0 %v1737
        %v1739 = vpop.f32.mrf.mxu0
        %v1740 = vadd.f32 %v1678, %v1739
        %v1741 = vand.u32 %v1117, 4294901760
        %v1742 = vsub.f32 %v1117, %v1741
        %1743 = vmatmul.f32.gmra.mxu0 %v1742
        %v1744 = vpop.f32.mrf.mxu0
        %v1745 = vadd.f32 %v1682, %v1744
        %v1746 = vand.u32 %v1118, 4294901760
        %v1747 = vsub.f32 %v1118, %v1746
        %1748 = vmatmul.f32.gmra.mxu0 %v1747
        %v1749 = vpop.f32.mrf.mxu0
        %v1750 = vadd.f32 %v1686, %v1749
        %1751 = vdwg.mxu0
        %v1752 = vand.u32 %v306, 4294901760
        %1753 = vmatpush.msra.mxu0 %v1752
        %v1754 = vand.u32 %v304, 4294901760
        %1755 = vmatpush.msra.mxu0 %v1754
        %v1756 = vand.u32 %v302, 4294901760
        %1757 = vmatpush.msra.mxu0 %v1756
        %v1758 = vand.u32 %v300, 4294901760
        %1759 = vmatpush.msra.mxu0 %v1758
        %v1760 = vand.u32 %v298, 4294901760
        %1761 = vmatpush.msra.mxu0 %v1760
        %v1762 = vand.u32 %v296, 4294901760
        %1763 = vmatpush.msra.mxu0 %v1762
        %v1764 = vand.u32 %v294, 4294901760
        %1765 = vmatpush.msra.mxu0 %v1764
        %v1766 = vand.u32 %v292, 4294901760
        %1767 = vmatpush.msra.mxu0 %v1766
        %v1768 = vand.u32 %v290, 4294901760
        %1769 = vmatpush.msra.mxu0 %v1768
        %v1770 = vand.u32 %v288, 4294901760
        %1771 = vmatpush.msra.mxu0 %v1770
        %v1772 = vand.u32 %v286, 4294901760
        %1773 = vmatpush.msra.mxu0 %v1772
        %v1774 = vand.u32 %v284, 4294901760
        %1775 = vmatpush.msra.mxu0 %v1774
        %v1776 = vand.u32 %v282, 4294901760
        %1777 = vmatpush.msra.mxu0 %v1776
        %v1778 = vand.u32 %v280, 4294901760
        %1779 = vmatpush.msra.mxu0 %v1778
        %v1780 = vand.u32 %v278, 4294901760
        %1781 = vmatpush.msra.mxu0 %v1780
        %v1782 = vand.u32 %v276, 4294901760
        %1783 = vmatpush.msra.mxu0 %v1782
        %v1784 = vand.u32 %v1116, 4294901760
        %v1785 = vsub.f32 %v1116, %v1784
        %v1786 = vand.u32 %v1785, 4294901760
        %1787 = vmatmul.f32.gmra.mxu0 %v1786
        %v1788 = vpop.f32.mrf.mxu0
        %v1789 = vadd.f32 %v1740, %v1788
        %v1790 = vand.u32 %v1117, 4294901760
        %v1791 = vsub.f32 %v1117, %v1790
        %v1792 = vand.u32 %v1791, 4294901760
        %1793 = vmatmul.f32.gmra.mxu0 %v1792
        %v1794 = vpop.f32.mrf.mxu0
        %v1795 = vadd.f32 %v1745, %v1794
        %v1796 = vand.u32 %v1118, 4294901760
        %v1797 = vsub.f32 %v1118, %v1796
        %v1798 = vand.u32 %v1797, 4294901760
        %1799 = vmatmul.f32.gmra.mxu0 %v1798
        %v1800 = vpop.f32.mrf.mxu0
        %v1801 = vadd.f32 %v1750, %v1800
        %1802 = vdwg.mxu0
        %v1803 = vand.u32 %v306, 4294901760
        %v1804 = vsub.f32 %v306, %v1803
        %v1805 = vand.u32 %v1804, 4294901760
        %1806 = vmatpush.msra.mxu0 %v1805
        %v1807 = vand.u32 %v304, 4294901760
        %v1808 = vsub.f32 %v304, %v1807
        %v1809 = vand.u32 %v1808, 4294901760
        %1810 = vmatpush.msra.mxu0 %v1809
        %v1811 = vand.u32 %v302, 4294901760
        %v1812 = vsub.f32 %v302, %v1811
        %v1813 = vand.u32 %v1812, 4294901760
        %1814 = vmatpush.msra.mxu0 %v1813
        %v1815 = vand.u32 %v300, 4294901760
        %v1816 = vsub.f32 %v300, %v1815
        %v1817 = vand.u32 %v1816, 4294901760
        %1818 = vmatpush.msra.mxu0 %v1817
        %v1819 = vand.u32 %v298, 4294901760
        %v1820 = vsub.f32 %v298, %v1819
        %v1821 = vand.u32 %v1820, 4294901760
        %1822 = vmatpush.msra.mxu0 %v1821
        %v1823 = vand.u32 %v296, 4294901760
        %v1824 = vsub.f32 %v296, %v1823
        %v1825 = vand.u32 %v1824, 4294901760
        %1826 = vmatpush.msra.mxu0 %v1825
        %v1827 = vand.u32 %v294, 4294901760
        %v1828 = vsub.f32 %v294, %v1827
        %v1829 = vand.u32 %v1828, 4294901760
        %1830 = vmatpush.msra.mxu0 %v1829
        %v1831 = vand.u32 %v292, 4294901760
        %v1832 = vsub.f32 %v292, %v1831
        %v1833 = vand.u32 %v1832, 4294901760
        %1834 = vmatpush.msra.mxu0 %v1833
        %v1835 = vand.u32 %v290, 4294901760
        %v1836 = vsub.f32 %v290, %v1835
        %v1837 = vand.u32 %v1836, 4294901760
        %1838 = vmatpush.msra.mxu0 %v1837
        %v1839 = vand.u32 %v288, 4294901760
        %v1840 = vsub.f32 %v288, %v1839
        %v1841 = vand.u32 %v1840, 4294901760
        %1842 = vmatpush.msra.mxu0 %v1841
        %v1843 = vand.u32 %v286, 4294901760
        %v1844 = vsub.f32 %v286, %v1843
        %v1845 = vand.u32 %v1844, 4294901760
        %1846 = vmatpush.msra.mxu0 %v1845
        %v1847 = vand.u32 %v284, 4294901760
        %v1848 = vsub.f32 %v284, %v1847
        %v1849 = vand.u32 %v1848, 4294901760
        %1850 = vmatpush.msra.mxu0 %v1849
        %v1851 = vand.u32 %v282, 4294901760
        %v1852 = vsub.f32 %v282, %v1851
        %v1853 = vand.u32 %v1852, 4294901760
        %1854 = vmatpush.msra.mxu0 %v1853
        %v1855 = vand.u32 %v280, 4294901760
        %v1856 = vsub.f32 %v280, %v1855
        %v1857 = vand.u32 %v1856, 4294901760
        %1858 = vmatpush.msra.mxu0 %v1857
        %v1859 = vand.u32 %v278, 4294901760
        %v1860 = vsub.f32 %v278, %v1859
        %v1861 = vand.u32 %v1860, 4294901760
        %1862 = vmatpush.msra.mxu0 %v1861
        %v1863 = vand.u32 %v276, 4294901760
        %v1864 = vsub.f32 %v276, %v1863
        %v1865 = vand.u32 %v1864, 4294901760
        %1866 = vmatpush.msra.mxu0 %v1865
        %v1867 = vand.u32 %v1116, 4294901760
        %1868 = vmatmul.f32.gmra.mxu0 %v1867
        %v1869 = vpop.f32.mrf.mxu0
        %v1870 = vadd.f32 %v1789, %v1869
        %v1871 = vand.u32 %v1117, 4294901760
        %1872 = vmatmul.f32.gmra.mxu0 %v1871
        %v1873 = vpop.f32.mrf.mxu0
        %v1874 = vadd.f32 %v1795, %v1873
        %v1875 = vand.u32 %v1118, 4294901760
        %1876 = vmatmul.f32.gmra.mxu0 %v1875
        %v1877 = vpop.f32.mrf.mxu0
        %v1878 = vadd.f32 %v1801, %v1877
        %1879 = vdwg.mxu0
        %v1880 = vand.u32 %v306, 4294901760
        %1881 = vmatpush.msra.mxu0 %v1880
        %v1882 = vand.u32 %v304, 4294901760
        %1883 = vmatpush.msra.mxu0 %v1882
        %v1884 = vand.u32 %v302, 4294901760
        %1885 = vmatpush.msra.mxu0 %v1884
        %v1886 = vand.u32 %v300, 4294901760
        %1887 = vmatpush.msra.mxu0 %v1886
        %v1888 = vand.u32 %v298, 4294901760
        %1889 = vmatpush.msra.mxu0 %v1888
        %v1890 = vand.u32 %v296, 4294901760
        %1891 = vmatpush.msra.mxu0 %v1890
        %v1892 = vand.u32 %v294, 4294901760
        %1893 = vmatpush.msra.mxu0 %v1892
        %v1894 = vand.u32 %v292, 4294901760
        %1895 = vmatpush.msra.mxu0 %v1894
        %v1896 = vand.u32 %v290, 4294901760
        %1897 = vmatpush.msra.mxu0 %v1896
        %v1898 = vand.u32 %v288, 4294901760
        %1899 = vmatpush.msra.mxu0 %v1898
        %v1900 = vand.u32 %v286, 4294901760
        %1901 = vmatpush.msra.mxu0 %v1900
        %v1902 = vand.u32 %v284, 4294901760
        %1903 = vmatpush.msra.mxu0 %v1902
        %v1904 = vand.u32 %v282, 4294901760
        %1905 = vmatpush.msra.mxu0 %v1904
        %v1906 = vand.u32 %v280, 4294901760
        %1907 = vmatpush.msra.mxu0 %v1906
        %v1908 = vand.u32 %v278, 4294901760
        %1909 = vmatpush.msra.mxu0 %v1908
        %v1910 = vand.u32 %v276, 4294901760
        %1911 = vmatpush.msra.mxu0 %v1910
        %v1912 = vand.u32 %v1116, 4294901760
        %1913 = vmatmul.f32.gmra.mxu0 %v1912
        %v1914 = vpop.f32.mrf.mxu0
        %v1915 = vadd.f32 %v1870, %v1914
        %v1916 = vand.u32 %v1117, 4294901760
        %1917 = vmatmul.f32.gmra.mxu0 %v1916
        %v1918 = vpop.f32.mrf.mxu0
        %v1919 = vadd.f32 %v1874, %v1918
        %v1920 = vand.u32 %v1118, 4294901760
        %1921 = vmatmul.f32.gmra.mxu0 %v1920
        %v1922 = vpop.f32.mrf.mxu0
        %v1923 = vadd.f32 %v1878, %v1922
        %1924 = vdwg.mxu0
        %v1925 = vmul.f32 %v703, %v1512
        %v1926 = vmul.f32 %v1106, %v1915
        %v1927 = vmul.f32 %v707, %v1516
        %v1928 = vmul.f32 %v1110, %v1919
        %v1929 = vadd.f32 %v1925, %v1927
        %v1930 = vadd.f32 %v1926, %v1928
        %v1931 = vmul.f32 %v711, %v1520
        %v1932 = vmul.f32 %v1114, %v1923
        %v1933 = vadd.f32 %v1929, %v1931
        %v1934 = vadd.f32 %v1930, %v1932
        %v1935 = vmul.f32 %v703, %v703
        %v1936 = vmul.f32 %v1106, %v1106
        %v1937 = vmul.f32 %v707, %v707
        %v1938 = vmul.f32 %v1110, %v1110
        %v1939 = vadd.f32 %v1935, %v1937
        %v1940 = vadd.f32 %v1936, %v1938
        %v1941 = vmul.f32 %v711, %v711
        %v1942 = vmul.f32 %v1114, %v1114
        %v1943 = vadd.f32 %v1939, %v1941
        %v1944 = vadd.f32 %v1940, %v1942
        %v1945 = vmul.f32 %v1512, %v1512
        %v1946 = vmul.f32 %v1915, %v1915
        %v1947 = vmul.f32 %v1516, %v1516
        %v1948 = vmul.f32 %v1919, %v1919
        %v1949 = vadd.f32 %v1945, %v1947
        %v1950 = vadd.f32 %v1946, %v1948
        %v1951 = vmul.f32 %v1520, %v1520
        %v1952 = vmul.f32 %v1923, %v1923
        %v1953 = vadd.f32 %v1949, %v1951
        %v1954 = vadd.f32 %v1950, %v1952
        %v1955 = vmul.f32 %v1943, %v1953
        %v1956 = vmul.f32 %v1944, %v1954
        %v1957 = vrsqrt.pop %v1955
        %v1958 = vmul.f32 %v1957, %v1955
        %v1959 = vmul.f32 %v1958, %v1957
        %v1960 = vmul.f32 0.5, %v1959
        %v1961 = vsub.f32 1.5, %v1960
        %v1962 = vmul.f32 %v1957, %v1961
        %vm1963 = vweird.f32 %v1955
        %vm1964 = vweird.f32 %v1957
        %vm1965 = vmor %vm1963, %vm1964
        %v1966 = vsel %vm1965, %v1957, %v1962
        %v1967 = vrsqrt.pop %v1956
        %v1968 = vmul.f32 %v1967, %v1956
        %v1969 = vmul.f32 %v1968, %v1967
        %v1970 = vmul.f32 0.5, %v1969
        %v1971 = vsub.f32 1.5, %v1970
        %v1972 = vmul.f32 %v1967, %v1971
        %vm1973 = vweird.f32 %v1956
        %vm1974 = vweird.f32 %v1967
        %vm1975 = vmor %vm1973, %vm1974
        %v1976 = vsel %vm1975, %v1967, %v1972
        %v1977 = vmul.f32 %v1933, %v1966
        %v1978 = vmul.f32 %v1934, %v1976
        %1979 = vst [vmem:[%s270] sm:$0xff] %v1977
        %1980 = vst [vmem:[%s270 + $0x8] sm:$0xff] %v1978
        %s1981 = sand.u32 %s123, 1
        %s1982 = scalar_lea.sflag [#allocation4], %s1981
        %s1983 = sand.u32 %s123, 1
        %s1984 = smul.addr %s1983, 16
        %s1985 = scalar_lea.vmem [#allocation8], %s1984
        // Predicated region
        $region45: #{tpu_custom_call.1} parent=31 // pred_check
          %p1986 = pneg %p133
        $region46: #{tpu_custom_call.1} parent=31 // pred_check_branch
          %1988 = sbr.rel (%p1986) target = $region48
        $region47: #{tpu_custom_call.1} parent=31 // pred_region
          %s1989 = smul.u32 2, %s27
          %1991 = vsyncadd %s1982, 0
          %s1992 = smul.addr %s28, 2
          %s1993 = sadd.s32 %s1989, %s1992
          %s1994 = smul.addr %s1993, 8
          %s1995 = scalar_lea.hbm %s3, %s1994
          %s1997 = sshll.u32 %s1985, 4
          %s1998 = int_to_ptr.vmem [resolvable:$true] %s1997
          %s1999 = sshll.u32 %s1995, 4
          %s2000 = int_to_ptr.hbm [resolvable:$true] %s1999
          %2002 = dma.vmem_to_hbm [thread:$0]  %s1998, 256, %s2000, %s1982
        $region48: #{tpu_custom_call.1} parent=31 // pred_fallthru
          _
      $region32: #{tpu_custom_call.1} parent=5 // pred_fallthru
        _
      %p2003 = scmp.le.s32.totalorder 2, %s18
      // Predicated region
      $region49: #{tpu_custom_call.1} parent=5 // pred_check
        %p2004 = pneg %p2003
      $region50: #{tpu_custom_call.1} parent=5 // pred_check_branch
        %2006 = sbr.rel (%p2004) target = $region52
      $region51: #{tpu_custom_call.1} parent=5 // pred_region
        %s2007 = ssub.s32 %s18, 2
        // Predicated region
        $region53: #{tpu_custom_call.1} parent=51 // pred_check
          %p2008 = pneg %p139
        $region54: #{tpu_custom_call.1} parent=51 // pred_check_branch
          %2010 = sbr.rel (%p2008) target = $region56
        $region55: #{tpu_custom_call.1} parent=51 // pred_region
          %s2011 = sand.u32 %s124, 1
          %s2012 = scalar_lea.sflag [#allocation4], %s2011
          %s2013 = sand.u32 %s124, 1
          %s2014 = smul.addr %s2013, 16
          %s2015 = scalar_lea.vmem [#allocation8], %s2014
          %2017 = dma.done %s2012, 256
        $region56: #{tpu_custom_call.1} parent=51 // pred_fallthru
          _
      $region52: #{tpu_custom_call.1} parent=5 // pred_fallthru
        _
    $region6: #{tpu_custom_call.1} parent=1 // loop_footer
      %s22 = sadd.s32 1, %s18
    $region7: #{tpu_custom_call.1} parent=1 // loop_footer_branch
      %17 = sbr.rel target = $region3
    $region8: #{tpu_custom_call.1} parent=1 // loop_exit
      _
    %2018 = vsyncpa [#allocation3], 1
    %s2019 = scalar_lea.sflag [#allocation3], 1
    %2020 = vsyncpa %s2019, 1
    %2021 = vsyncpa [#allocation6], 1
    %s2022 = scalar_lea.sflag [#allocation6], 1
    %2023 = vsyncpa %s2022, 1
    %2024 = vsyncpa [#allocation4], 1
    %s2025 = scalar_lea.sflag [#allocation4], 1
    %2026 = vsyncpa %s2025, 1

</llo_original>
